<compile_context>
chip_gen: v5e
topology: v5e:2x2
jax: 0.10.0
libtpu: 0.0.40
codegen_flags: <defaults>
</compile_context>

<pallas_src>
import jax
import jax.numpy as jnp
from jax import lax
from jax.experimental import pallas as pl
from jax.experimental.pallas import tpu as pltpu


# ----------------------------- Pallas kernel ------------------------------ #
def _make_encoder_kernel(H, W):
    """Builds the fused 4-layer conv3x3 + folded-BN + ReLU kernel for HxW images."""
    HW = H * W
    TAPS = [(dh, dw) for dh in (-1, 0, 1) for dw in (-1, 0, 1)]

    def kernel(x_ref, w1, b1, w2, b2, w3, b3, w4, b4, o_ref):
        # ---- boundary masks: computed once, reused by all 4 layers ---------
        pix = lax.broadcasted_iota(jnp.int32, (1, HW), 1)          # flat index p
        if (W & (W - 1)) == 0:                                     # pow-2 fast path
            col = jnp.bitwise_and(pix, W - 1)                      # p % W
        else:
            col = pix % W
        col_ok = {-1: (col >= 1).astype(jnp.float32),              # dw == -1 valid
                  +1: (col < (W - 1)).astype(jnp.float32)}         # dw == +1 valid
        row_ok = {-1: (pix >= W).astype(jnp.float32),              # dh == -1 valid
                  +1: (pix < (HW - W)).astype(jnp.float32)}        # dh == +1 valid
        masks = {}
        for dh, dw in TAPS:
            if dh == 0 and dw == 0:
                masks[(dh, dw)] = None
            elif dh == 0:
                masks[(dh, dw)] = col_ok[dw]
            elif dw == 0:
                masks[(dh, dw)] = row_ok[dh]
            else:
                masks[(dh, dw)] = row_ok[dh] * col_ok[dw]

        def conv_bn_relu(a, w_ref, b_ref):
            # Build the (9*Cin, HW) im2col operand: 9 lane rotations (XLU) of the
            # flat activation, zeroed at the image border by precomputed masks.
            taps = []
            for dh, dw in TAPS:
                off = dh * W + dw                        # want r[p] = a[p + off]
                t = a if off == 0 else pltpu.roll(a, shift=(-off) % HW, axis=1)
                m = masks[(dh, dw)]
                if m is not None:
                    t = t * m                            # zero invalid (wrapped) lanes
                taps.append(t)
            k = jnp.concatenate(taps, axis=0)            # (9*Cin, HW)
            # One K-packed MXU matmul; BN scale pre-folded into w, bias into b.
            y = jnp.dot(w_ref[...], k, preferred_element_type=jnp.float32)
            y = y + b_ref[...]                           # (Cout, 1) lane broadcast
            return jnp.maximum(y, 0.0)

        a = x_ref[0]                                     # (Cin, HW), lane-dense
        a = conv_bn_relu(a, w1, b1)
        a = conv_bn_relu(a, w2, b2)
        a = conv_bn_relu(a, w3, b3)
        a = conv_bn_relu(a, w4, b4)
        o_ref[...] = a[None].astype(o_ref.dtype)         # (1, Cout, HW) unmasked store

    return kernel


# ------------------------------ Wrapper ------------------------------------ #
def _fold_layer(p, eps):
    """Fold conv bias + eval-mode BN into a (Cout, 9*Cin) weight and (Cout,1) bias."""
    cout, cin = p["w"].shape[0], p["w"].shape[1]
    scale = p["gamma"] / jnp.sqrt(p["var"] + eps)
    # OIHW -> (O, KH, KW, I) -> (O, 9*I); K index = (kh*3 + kw)*Cin + ci,
    # matching the tap order (dh, dw) used inside the kernel.
    wmat = jnp.transpose(p["w"], (0, 2, 3, 1)).reshape(cout, 9 * cin)
    w_f = wmat * scale[:, None]
    b_f = (scale * (p["b"] - p["mean"]) + p["beta"]).reshape(cout, 1)
    return w_f, b_f


def encoder_apply(x_nchw, params, eps=1e-5):
    N, c0, H, W = x_nchw.shape
    HW = H * W
    x_flat = x_nchw.reshape(N, c0, HW)               # NCHW -> (N, C, H*W): free reshape

    folded = []
    for p in params:
        folded.extend(_fold_layer(p, eps))
    cout = params[-1]["w"].shape[0]

    in_specs = [pl.BlockSpec((1, c0, HW), lambda n: (n, 0, 0))]
    in_specs += [pl.BlockSpec(arr.shape, lambda n: (0, 0)) for arr in folded]

    out = pl.pallas_call(
        _make_encoder_kernel(H, W),
        out_shape=jax.ShapeDtypeStruct((N, cout, HW), jnp.float32),
        grid_spec=pltpu.PrefetchScalarGridSpec(
            num_scalar_prefetch=0,
            grid=(N,),
            in_specs=in_specs,
            out_specs=pl.BlockSpec((1, cout, HW), lambda n: (n, 0, 0)),
        ),
        compiler_params=pltpu.CompilerParams(
            dimension_semantics=("parallel",)),
    )(x_flat, *folded)
    return out.reshape(N, cout, H, W)                # already NCHW: reshape only


encoder_forward = jax.jit(encoder_apply)


# ------------------------------ Parameters --------------------------------- #
def make_layer_params(key, cin, cout):
    kw, kb, kg, kbeta, km, kv = jax.random.split(key, 6)
    return dict(
        w=0.1 * jax.random.normal(kw, (cout, cin, 3, 3), jnp.float32),   # OIHW
        b=0.1 * jax.random.normal(kb, (cout,), jnp.float32),
        gamma=1.0 + 0.1 * jax.random.normal(kg, (cout,), jnp.float32),
        beta=0.1 * jax.random.normal(kbeta, (cout,), jnp.float32),
        mean=0.1 * jax.random.normal(km, (cout,), jnp.float32),
        var=1.0 + 0.1 * jax.random.uniform(kv, (cout,), jnp.float32),
    )


def init_encoder_params(key, in_channels, out_channels):
    c_half = out_channels // 2
    dims = [(in_channels, c_half), (c_half, c_half),
            (c_half, out_channels), (out_channels, out_channels)]
    keys = jax.random.split(key, 4)
    return [make_layer_params(k, ci, co) for k, (ci, co) in zip(keys, dims)]


# ------------------------- Pure-JAX reference ------------------------------ #
def encoder_reference(x_nchw, params, eps=1e-5):
    h = x_nchw
    for p in params:
        conv = lax.conv_general_dilated(
            h, p["w"], window_strides=(1, 1), padding="SAME",
            dimension_numbers=("NCHW", "OIHW", "NCHW"))
        conv = conv + p["b"][None, :, None, None]
        scale = (p["gamma"] / jnp.sqrt(p["var"] + eps))[None, :, None, None]
        mean = p["mean"][None, :, None, None]
        beta = p["beta"][None, :, None, None]
        h = jnp.maximum(scale * (conv - mean) + beta, 0.0)
    return h


# ---------------------------------- Main ----------------------------------- #
if __name__ == "__main__":
    key = jax.random.PRNGKey(0)
    k_x, k_p = jax.random.split(key)

    N, C_IN, H, W = 2, 4, 16, 16
    OUT_CHANNELS = 32
    PATCH_SIZE = 4  # unused by forward(); kept for module-signature fidelity

    x = jax.random.normal(k_x, (N, C_IN, H, W), jnp.float32)
    params = init_encoder_params(k_p, C_IN, OUT_CHANNELS)

    y = encoder_forward(x, params)
    y = jax.block_until_ready(y)

    y_ref = encoder_reference(x, params)
    assert y.shape == (N, OUT_CHANNELS, H, W), y.shape
    assert jnp.allclose(y, y_ref, atol=1e-3, rtol=1e-3), (
        float(jnp.max(jnp.abs(y - y_ref))))

    print("KERNEL_OK")
</pallas_src>

<mosaic_0001>
module attributes {stable_mosaic.version = 11 : i64} {
  func.func @kernel(%arg0: i32, %arg1: memref<1x4x256xf32, #tpu.memory_space<vmem>>, %arg2: memref<16x36xf32, #tpu.memory_space<vmem>>, %arg3: memref<16x1xf32, #tpu.memory_space<vmem>>, %arg4: memref<16x144xf32, #tpu.memory_space<vmem>>, %arg5: memref<16x1xf32, #tpu.memory_space<vmem>>, %arg6: memref<32x144xf32, #tpu.memory_space<vmem>>, %arg7: memref<32x1xf32, #tpu.memory_space<vmem>>, %arg8: memref<32x288xf32, #tpu.memory_space<vmem>>, %arg9: memref<32x1xf32, #tpu.memory_space<vmem>>, %arg10: memref<1x32x256xf32, #tpu.memory_space<vmem>>) attributes {dimension_semantics = [#tpu.dimension_semantics<parallel>], iteration_bounds = array<i64: 2>, scalar_prefetch = 0 : i64, scratch_operands = 0 : i64, tpu.core_type = #tpu.core_type<tc>, window_params = [{transform_indices = @transform_0, window_bounds = array<i64: 1, 4, 256>}, {pipeline_mode = #tpu.pipeline_mode<synchronous>, transform_indices = @transform_1, window_bounds = array<i64: 16, 36>}, {pipeline_mode = #tpu.pipeline_mode<synchronous>, transform_indices = @transform_2, window_bounds = array<i64: 16, 1>}, {pipeline_mode = #tpu.pipeline_mode<synchronous>, transform_indices = @transform_3, window_bounds = array<i64: 16, 144>}, {pipeline_mode = #tpu.pipeline_mode<synchronous>, transform_indices = @transform_4, window_bounds = array<i64: 16, 1>}, {pipeline_mode = #tpu.pipeline_mode<synchronous>, transform_indices = @transform_5, window_bounds = array<i64: 32, 144>}, {pipeline_mode = #tpu.pipeline_mode<synchronous>, transform_indices = @transform_6, window_bounds = array<i64: 32, 1>}, {pipeline_mode = #tpu.pipeline_mode<synchronous>, transform_indices = @transform_7, window_bounds = array<i64: 32, 288>}, {pipeline_mode = #tpu.pipeline_mode<synchronous>, transform_indices = @transform_8, window_bounds = array<i64: 32, 1>}, {transform_indices = @transform_9, window_bounds = array<i64: 1, 32, 256>}]} {
    %0 = tpu.iota {dimensions = array<i32: 1>} : vector<1x256xi32>
    %c15_i32 = arith.constant 15 : i32
    %1 = vector.broadcast %c15_i32 : i32 to vector<1x256xi32>
    %2 = arith.andi %0, %1 : vector<1x256xi32>
    %c1_i32 = arith.constant 1 : i32
    %3 = vector.broadcast %c1_i32 : i32 to vector<1x256xi32>
    %4 = arith.cmpi sge, %2, %3 : vector<1x256xi32>
    %5 = arith.extui %4 : vector<1x256xi1> to vector<1x256xi32>
    %6 = arith.sitofp %5 : vector<1x256xi32> to vector<1x256xf32>
    %c15_i32_0 = arith.constant 15 : i32
    %7 = vector.broadcast %c15_i32_0 : i32 to vector<1x256xi32>
    %8 = arith.cmpi slt, %2, %7 : vector<1x256xi32>
    %9 = arith.extui %8 : vector<1x256xi1> to vector<1x256xi32>
    %10 = arith.sitofp %9 : vector<1x256xi32> to vector<1x256xf32>
    %c16_i32 = arith.constant 16 : i32
    %11 = vector.broadcast %c16_i32 : i32 to vector<1x256xi32>
    %12 = arith.cmpi sge, %0, %11 : vector<1x256xi32>
    %13 = arith.extui %12 : vector<1x256xi1> to vector<1x256xi32>
    %14 = arith.sitofp %13 : vector<1x256xi32> to vector<1x256xf32>
    %c240_i32 = arith.constant 240 : i32
    %15 = vector.broadcast %c240_i32 : i32 to vector<1x256xi32>
    %16 = arith.cmpi slt, %0, %15 : vector<1x256xi32>
    %17 = arith.extui %16 : vector<1x256xi1> to vector<1x256xi32>
    %18 = arith.sitofp %17 : vector<1x256xi32> to vector<1x256xf32>
    %19 = arith.mulf %14, %6 : vector<1x256xf32>
    %20 = arith.mulf %14, %10 : vector<1x256xf32>
    %21 = arith.mulf %18, %6 : vector<1x256xf32>
    %22 = arith.mulf %18, %10 : vector<1x256xf32>
    %c0 = arith.constant 0 : index
    %c0_1 = arith.constant 0 : index
    %c0_2 = arith.constant 0 : index
    %23 = vector.load %arg1[%c0, %c0_1, %c0_2] : memref<1x4x256xf32, #tpu.memory_space<vmem>>, vector<1x4x256xf32>
    %24 = vector.shape_cast %23 : vector<1x4x256xf32> to vector<4x256xf32>
    %c17_i32 = arith.constant 17 : i32
    %25 = tpu.dynamic_rotate %24 by %c17_i32 dim 1 : vector<4x256xf32>, i32 -> vector<4x256xf32>
    %26 = vector.broadcast %19 : vector<1x256xf32> to vector<4x256xf32>
    %27 = arith.mulf %25, %26 : vector<4x256xf32>
    %c16_i32_3 = arith.constant 16 : i32
    %28 = tpu.dynamic_rotate %24 by %c16_i32_3 dim 1 : vector<4x256xf32>, i32 -> vector<4x256xf32>
    %29 = vector.broadcast %14 : vector<1x256xf32> to vector<4x256xf32>
    %30 = arith.mulf %28, %29 : vector<4x256xf32>
    %c15_i32_4 = arith.constant 15 : i32
    %31 = tpu.dynamic_rotate %24 by %c15_i32_4 dim 1 : vector<4x256xf32>, i32 -> vector<4x256xf32>
    %32 = vector.broadcast %20 : vector<1x256xf32> to vector<4x256xf32>
    %33 = arith.mulf %31, %32 : vector<4x256xf32>
    %c1_i32_5 = arith.constant 1 : i32
    %34 = tpu.dynamic_rotate %24 by %c1_i32_5 dim 1 : vector<4x256xf32>, i32 -> vector<4x256xf32>
    %35 = vector.broadcast %6 : vector<1x256xf32> to vector<4x256xf32>
    %36 = arith.mulf %34, %35 : vector<4x256xf32>
    %c255_i32 = arith.constant 255 : i32
    %37 = tpu.dynamic_rotate %24 by %c255_i32 dim 1 : vector<4x256xf32>, i32 -> vector<4x256xf32>
    %38 = vector.broadcast %10 : vector<1x256xf32> to vector<4x256xf32>
    %39 = arith.mulf %37, %38 : vector<4x256xf32>
    %c241_i32 = arith.constant 241 : i32
    %40 = tpu.dynamic_rotate %24 by %c241_i32 dim 1 : vector<4x256xf32>, i32 -> vector<4x256xf32>
    %41 = vector.broadcast %21 : vector<1x256xf32> to vector<4x256xf32>
    %42 = arith.mulf %40, %41 : vector<4x256xf32>
    %c240_i32_6 = arith.constant 240 : i32
    %43 = tpu.dynamic_rotate %24 by %c240_i32_6 dim 1 : vector<4x256xf32>, i32 -> vector<4x256xf32>
    %44 = vector.broadcast %18 : vector<1x256xf32> to vector<4x256xf32>
    %45 = arith.mulf %43, %44 : vector<4x256xf32>
    %c239_i32 = arith.constant 239 : i32
    %46 = tpu.dynamic_rotate %24 by %c239_i32 dim 1 : vector<4x256xf32>, i32 -> vector<4x256xf32>
    %47 = vector.broadcast %22 : vector<1x256xf32> to vector<4x256xf32>
    %48 = arith.mulf %46, %47 : vector<4x256xf32>
    %49 = tpu.concatenate %27, %30, %33, %36, %24, %39, %42, %45, %48 in 0 : vector<4x256xf32>, vector<4x256xf32>, vector<4x256xf32>, vector<4x256xf32>, vector<4x256xf32>, vector<4x256xf32>, vector<4x256xf32>, vector<4x256xf32>, vector<4x256xf32> -> vector<36x256xf32>
    %c0_7 = arith.constant 0 : index
    %c0_8 = arith.constant 0 : index
    %50 = vector.load %arg2[%c0_7, %c0_8] : memref<16x36xf32, #tpu.memory_space<vmem>>, vector<16x36xf32>
    %cst = arith.constant dense<0.000000e+00> : vector<16x256xf32>
    %51 = tpu.matmul %50, %49, %cst {dimension_numbers = #tpu.dot_dimension_numbers<[1], [0], [0], [1], [0, 0, 1, 1], [], []>} : vector<16x36xf32>, vector<36x256xf32>, vector<16x256xf32> -> vector<16x256xf32>
    %c0_9 = arith.constant 0 : index
    %c0_10 = arith.constant 0 : index
    %52 = vector.load %arg3[%c0_9, %c0_10] : memref<16x1xf32, #tpu.memory_space<vmem>>, vector<16x1xf32>
    %53 = vector.broadcast %52 : vector<16x1xf32> to vector<16x256xf32>
    %54 = arith.addf %51, %53 : vector<16x256xf32>
    %cst_11 = arith.constant 0.000000e+00 : f32
    %55 = vector.broadcast %cst_11 : f32 to vector<16x256xf32>
    %56 = arith.maximumf %54, %55 : vector<16x256xf32>
    %c17_i32_12 = arith.constant 17 : i32
    %57 = tpu.dynamic_rotate %56 by %c17_i32_12 dim 1 : vector<16x256xf32>, i32 -> vector<16x256xf32>
    %58 = vector.broadcast %19 : vector<1x256xf32> to vector<16x256xf32>
    %59 = arith.mulf %57, %58 : vector<16x256xf32>
    %c16_i32_13 = arith.constant 16 : i32
    %60 = tpu.dynamic_rotate %56 by %c16_i32_13 dim 1 : vector<16x256xf32>, i32 -> vector<16x256xf32>
    %61 = vector.broadcast %14 : vector<1x256xf32> to vector<16x256xf32>
    %62 = arith.mulf %60, %61 : vector<16x256xf32>
    %c15_i32_14 = arith.constant 15 : i32
    %63 = tpu.dynamic_rotate %56 by %c15_i32_14 dim 1 : vector<16x256xf32>, i32 -> vector<16x256xf32>
    %64 = vector.broadcast %20 : vector<1x256xf32> to vector<16x256xf32>
    %65 = arith.mulf %63, %64 : vector<16x256xf32>
    %c1_i32_15 = arith.constant 1 : i32
    %66 = tpu.dynamic_rotate %56 by %c1_i32_15 dim 1 : vector<16x256xf32>, i32 -> vector<16x256xf32>
    %67 = vector.broadcast %6 : vector<1x256xf32> to vector<16x256xf32>
    %68 = arith.mulf %66, %67 : vector<16x256xf32>
    %c255_i32_16 = arith.constant 255 : i32
    %69 = tpu.dynamic_rotate %56 by %c255_i32_16 dim 1 : vector<16x256xf32>, i32 -> vector<16x256xf32>
    %70 = vector.broadcast %10 : vector<1x256xf32> to vector<16x256xf32>
    %71 = arith.mulf %69, %70 : vector<16x256xf32>
    %c241_i32_17 = arith.constant 241 : i32
    %72 = tpu.dynamic_rotate %56 by %c241_i32_17 dim 1 : vector<16x256xf32>, i32 -> vector<16x256xf32>
    %73 = vector.broadcast %21 : vector<1x256xf32> to vector<16x256xf32>
    %74 = arith.mulf %72, %73 : vector<16x256xf32>
    %c240_i32_18 = arith.constant 240 : i32
    %75 = tpu.dynamic_rotate %56 by %c240_i32_18 dim 1 : vector<16x256xf32>, i32 -> vector<16x256xf32>
    %76 = vector.broadcast %18 : vector<1x256xf32> to vector<16x256xf32>
    %77 = arith.mulf %75, %76 : vector<16x256xf32>
    %c239_i32_19 = arith.constant 239 : i32
    %78 = tpu.dynamic_rotate %56 by %c239_i32_19 dim 1 : vector<16x256xf32>, i32 -> vector<16x256xf32>
    %79 = vector.broadcast %22 : vector<1x256xf32> to vector<16x256xf32>
    %80 = arith.mulf %78, %79 : vector<16x256xf32>
    %81 = tpu.concatenate %59, %62, %65, %68, %56, %71, %74, %77, %80 in 0 : vector<16x256xf32>, vector<16x256xf32>, vector<16x256xf32>, vector<16x256xf32>, vector<16x256xf32>, vector<16x256xf32>, vector<16x256xf32>, vector<16x256xf32>, vector<16x256xf32> -> vector<144x256xf32>
    %c0_20 = arith.constant 0 : index
    %c0_21 = arith.constant 0 : index
    %82 = vector.load %arg4[%c0_20, %c0_21] : memref<16x144xf32, #tpu.memory_space<vmem>>, vector<16x144xf32>
    %cst_22 = arith.constant dense<0.000000e+00> : vector<16x256xf32>
    %83 = tpu.matmul %82, %81, %cst_22 {dimension_numbers = #tpu.dot_dimension_numbers<[1], [0], [0], [1], [0, 0, 1, 1], [], []>} : vector<16x144xf32>, vector<144x256xf32>, vector<16x256xf32> -> vector<16x256xf32>
    %c0_23 = arith.constant 0 : index
    %c0_24 = arith.constant 0 : index
    %84 = vector.load %arg5[%c0_23, %c0_24] : memref<16x1xf32, #tpu.memory_space<vmem>>, vector<16x1xf32>
    %85 = vector.broadcast %84 : vector<16x1xf32> to vector<16x256xf32>
    %86 = arith.addf %83, %85 : vector<16x256xf32>
    %cst_25 = arith.constant 0.000000e+00 : f32
    %87 = vector.broadcast %cst_25 : f32 to vector<16x256xf32>
    %88 = arith.maximumf %86, %87 : vector<16x256xf32>
    %c17_i32_26 = arith.constant 17 : i32
    %89 = tpu.dynamic_rotate %88 by %c17_i32_26 dim 1 : vector<16x256xf32>, i32 -> vector<16x256xf32>
    %90 = vector.broadcast %19 : vector<1x256xf32> to vector<16x256xf32>
    %91 = arith.mulf %89, %90 : vector<16x256xf32>
    %c16_i32_27 = arith.constant 16 : i32
    %92 = tpu.dynamic_rotate %88 by %c16_i32_27 dim 1 : vector<16x256xf32>, i32 -> vector<16x256xf32>
    %93 = vector.broadcast %14 : vector<1x256xf32> to vector<16x256xf32>
    %94 = arith.mulf %92, %93 : vector<16x256xf32>
    %c15_i32_28 = arith.constant 15 : i32
    %95 = tpu.dynamic_rotate %88 by %c15_i32_28 dim 1 : vector<16x256xf32>, i32 -> vector<16x256xf32>
    %96 = vector.broadcast %20 : vector<1x256xf32> to vector<16x256xf32>
    %97 = arith.mulf %95, %96 : vector<16x256xf32>
    %c1_i32_29 = arith.constant 1 : i32
    %98 = tpu.dynamic_rotate %88 by %c1_i32_29 dim 1 : vector<16x256xf32>, i32 -> vector<16x256xf32>
    %99 = vector.broadcast %6 : vector<1x256xf32> to vector<16x256xf32>
    %100 = arith.mulf %98, %99 : vector<16x256xf32>
    %c255_i32_30 = arith.constant 255 : i32
    %101 = tpu.dynamic_rotate %88 by %c255_i32_30 dim 1 : vector<16x256xf32>, i32 -> vector<16x256xf32>
    %102 = vector.broadcast %10 : vector<1x256xf32> to vector<16x256xf32>
    %103 = arith.mulf %101, %102 : vector<16x256xf32>
    %c241_i32_31 = arith.constant 241 : i32
    %104 = tpu.dynamic_rotate %88 by %c241_i32_31 dim 1 : vector<16x256xf32>, i32 -> vector<16x256xf32>
    %105 = vector.broadcast %21 : vector<1x256xf32> to vector<16x256xf32>
    %106 = arith.mulf %104, %105 : vector<16x256xf32>
    %c240_i32_32 = arith.constant 240 : i32
    %107 = tpu.dynamic_rotate %88 by %c240_i32_32 dim 1 : vector<16x256xf32>, i32 -> vector<16x256xf32>
    %108 = vector.broadcast %18 : vector<1x256xf32> to vector<16x256xf32>
    %109 = arith.mulf %107, %108 : vector<16x256xf32>
    %c239_i32_33 = arith.constant 239 : i32
    %110 = tpu.dynamic_rotate %88 by %c239_i32_33 dim 1 : vector<16x256xf32>, i32 -> vector<16x256xf32>
    %111 = vector.broadcast %22 : vector<1x256xf32> to vector<16x256xf32>
    %112 = arith.mulf %110, %111 : vector<16x256xf32>
    %113 = tpu.concatenate %91, %94, %97, %100, %88, %103, %106, %109, %112 in 0 : vector<16x256xf32>, vector<16x256xf32>, vector<16x256xf32>, vector<16x256xf32>, vector<16x256xf32>, vector<16x256xf32>, vector<16x256xf32>, vector<16x256xf32>, vector<16x256xf32> -> vector<144x256xf32>
    %c0_34 = arith.constant 0 : index
    %c0_35 = arith.constant 0 : index
    %114 = vector.load %arg6[%c0_34, %c0_35] : memref<32x144xf32, #tpu.memory_space<vmem>>, vector<32x144xf32>
    %cst_36 = arith.constant dense<0.000000e+00> : vector<32x256xf32>
    %115 = tpu.matmul %114, %113, %cst_36 {dimension_numbers = #tpu.dot_dimension_numbers<[1], [0], [0], [1], [0, 0, 1, 1], [], []>} : vector<32x144xf32>, vector<144x256xf32>, vector<32x256xf32> -> vector<32x256xf32>
    %c0_37 = arith.constant 0 : index
    %c0_38 = arith.constant 0 : index
    %116 = vector.load %arg7[%c0_37, %c0_38] : memref<32x1xf32, #tpu.memory_space<vmem>>, vector<32x1xf32>
    %117 = vector.broadcast %116 : vector<32x1xf32> to vector<32x256xf32>
    %118 = arith.addf %115, %117 : vector<32x256xf32>
    %cst_39 = arith.constant 0.000000e+00 : f32
    %119 = vector.broadcast %cst_39 : f32 to vector<32x256xf32>
    %120 = arith.maximumf %118, %119 : vector<32x256xf32>
    %c17_i32_40 = arith.constant 17 : i32
    %121 = tpu.dynamic_rotate %120 by %c17_i32_40 dim 1 : vector<32x256xf32>, i32 -> vector<32x256xf32>
    %122 = vector.broadcast %19 : vector<1x256xf32> to vector<32x256xf32>
    %123 = arith.mulf %121, %122 : vector<32x256xf32>
    %c16_i32_41 = arith.constant 16 : i32
    %124 = tpu.dynamic_rotate %120 by %c16_i32_41 dim 1 : vector<32x256xf32>, i32 -> vector<32x256xf32>
    %125 = vector.broadcast %14 : vector<1x256xf32> to vector<32x256xf32>
    %126 = arith.mulf %124, %125 : vector<32x256xf32>
    %c15_i32_42 = arith.constant 15 : i32
    %127 = tpu.dynamic_rotate %120 by %c15_i32_42 dim 1 : vector<32x256xf32>, i32 -> vector<32x256xf32>
    %128 = vector.broadcast %20 : vector<1x256xf32> to vector<32x256xf32>
    %129 = arith.mulf %127, %128 : vector<32x256xf32>
    %c1_i32_43 = arith.constant 1 : i32
    %130 = tpu.dynamic_rotate %120 by %c1_i32_43 dim 1 : vector<32x256xf32>, i32 -> vector<32x256xf32>
    %131 = vector.broadcast %6 : vector<1x256xf32> to vector<32x256xf32>
    %132 = arith.mulf %130, %131 : vector<32x256xf32>
    %c255_i32_44 = arith.constant 255 : i32
    %133 = tpu.dynamic_rotate %120 by %c255_i32_44 dim 1 : vector<32x256xf32>, i32 -> vector<32x256xf32>
    %134 = vector.broadcast %10 : vector<1x256xf32> to vector<32x256xf32>
    %135 = arith.mulf %133, %134 : vector<32x256xf32>
    %c241_i32_45 = arith.constant 241 : i32
    %136 = tpu.dynamic_rotate %120 by %c241_i32_45 dim 1 : vector<32x256xf32>, i32 -> vector<32x256xf32>
    %137 = vector.broadcast %21 : vector<1x256xf32> to vector<32x256xf32>
    %138 = arith.mulf %136, %137 : vector<32x256xf32>
    %c240_i32_46 = arith.constant 240 : i32
    %139 = tpu.dynamic_rotate %120 by %c240_i32_46 dim 1 : vector<32x256xf32>, i32 -> vector<32x256xf32>
    %140 = vector.broadcast %18 : vector<1x256xf32> to vector<32x256xf32>
    %141 = arith.mulf %139, %140 : vector<32x256xf32>
    %c239_i32_47 = arith.constant 239 : i32
    %142 = tpu.dynamic_rotate %120 by %c239_i32_47 dim 1 : vector<32x256xf32>, i32 -> vector<32x256xf32>
    %143 = vector.broadcast %22 : vector<1x256xf32> to vector<32x256xf32>
    %144 = arith.mulf %142, %143 : vector<32x256xf32>
    %145 = tpu.concatenate %123, %126, %129, %132, %120, %135, %138, %141, %144 in 0 : vector<32x256xf32>, vector<32x256xf32>, vector<32x256xf32>, vector<32x256xf32>, vector<32x256xf32>, vector<32x256xf32>, vector<32x256xf32>, vector<32x256xf32>, vector<32x256xf32> -> vector<288x256xf32>
    %c0_48 = arith.constant 0 : index
    %c0_49 = arith.constant 0 : index
    %146 = vector.load %arg8[%c0_48, %c0_49] : memref<32x288xf32, #tpu.memory_space<vmem>>, vector<32x288xf32>
    %cst_50 = arith.constant dense<0.000000e+00> : vector<32x256xf32>
    %147 = tpu.matmul %146, %145, %cst_50 {dimension_numbers = #tpu.dot_dimension_numbers<[1], [0], [0], [1], [0, 0, 1, 1], [], []>} : vector<32x288xf32>, vector<288x256xf32>, vector<32x256xf32> -> vector<32x256xf32>
    %c0_51 = arith.constant 0 : index
    %c0_52 = arith.constant 0 : index
    %148 = vector.load %arg9[%c0_51, %c0_52] : memref<32x1xf32, #tpu.memory_space<vmem>>, vector<32x1xf32>
    %149 = vector.broadcast %148 : vector<32x1xf32> to vector<32x256xf32>
    %150 = arith.addf %147, %149 : vector<32x256xf32>
    %cst_53 = arith.constant 0.000000e+00 : f32
    %151 = vector.broadcast %cst_53 : f32 to vector<32x256xf32>
    %152 = arith.maximumf %150, %151 : vector<32x256xf32>
    %153 = vector.shape_cast %152 : vector<32x256xf32> to vector<1x32x256xf32>
    %c0_54 = arith.constant 0 : index
    %c0_55 = arith.constant 0 : index
    %c0_56 = arith.constant 0 : index
    %154 = vector.load %arg10[%c0_54, %c0_55, %c0_56] : memref<1x32x256xf32, #tpu.memory_space<vmem>>, vector<1x32x256xf32>
    tpu.vector_store %arg10[%c0_54, %c0_55, %c0_56], %153 {strides = array<i32>} : memref<1x32x256xf32, #tpu.memory_space<vmem>>, vector<1x32x256xf32>,
    return
  }
  func.func @transform_0(%arg0: i32) -> (i32, i32, i32) {
    %c0_i32 = arith.constant 0 : i32
    %c0_i32_0 = arith.constant 0 : i32
    %c0_i32_1 = arith.constant 0 : i32
    return %arg0, %c0_i32, %c0_i32_0 : i32, i32, i32
  }
  func.func @transform_1(%arg0: i32) -> (i32, i32) {
    %c0_i32 = arith.constant 0 : i32
    %c0_i32_0 = arith.constant 0 : i32
    %c0_i32_1 = arith.constant 0 : i32
    return %c0_i32, %c0_i32_0 : i32, i32
  }
  func.func @transform_2(%arg0: i32) -> (i32, i32) {
    %c0_i32 = arith.constant 0 : i32
    %c0_i32_0 = arith.constant 0 : i32
    %c0_i32_1 = arith.constant 0 : i32
    return %c0_i32, %c0_i32_0 : i32, i32
  }
  func.func @transform_3(%arg0: i32) -> (i32, i32) {
    %c0_i32 = arith.constant 0 : i32
    %c0_i32_0 = arith.constant 0 : i32
    %c0_i32_1 = arith.constant 0 : i32
    return %c0_i32, %c0_i32_0 : i32, i32
  }
  func.func @transform_4(%arg0: i32) -> (i32, i32) {
    %c0_i32 = arith.constant 0 : i32
    %c0_i32_0 = arith.constant 0 : i32
    %c0_i32_1 = arith.constant 0 : i32
    return %c0_i32, %c0_i32_0 : i32, i32
  }
  func.func @transform_5(%arg0: i32) -> (i32, i32) {
    %c0_i32 = arith.constant 0 : i32
    %c0_i32_0 = arith.constant 0 : i32
    %c0_i32_1 = arith.constant 0 : i32
    return %c0_i32, %c0_i32_0 : i32, i32
  }
  func.func @transform_6(%arg0: i32) -> (i32, i32) {
    %c0_i32 = arith.constant 0 : i32
    %c0_i32_0 = arith.constant 0 : i32
    %c0_i32_1 = arith.constant 0 : i32
    return %c0_i32, %c0_i32_0 : i32, i32
  }
  func.func @transform_7(%arg0: i32) -> (i32, i32) {
    %c0_i32 = arith.constant 0 : i32
    %c0_i32_0 = arith.constant 0 : i32
    %c0_i32_1 = arith.constant 0 : i32
    return %c0_i32, %c0_i32_0 : i32, i32
  }
  func.func @transform_8(%arg0: i32) -> (i32, i32) {
    %c0_i32 = arith.constant 0 : i32
    %c0_i32_0 = arith.constant 0 : i32
    %c0_i32_1 = arith.constant 0 : i32
    return %c0_i32, %c0_i32_0 : i32, i32
  }
  func.func @transform_9(%arg0: i32) -> (i32, i32, i32) {
    %c0_i32 = arith.constant 0 : i32
    %c0_i32_0 = arith.constant 0 : i32
    %c0_i32_1 = arith.constant 0 : i32
    return %arg0, %c0_i32, %c0_i32_0 : i32, i32, i32
  }
}

</mosaic_0001>

<llo_original>
// kernel: encoder_apply.1
$region0: #{encoder_apply.1}
  #allocation0 [shape = 'u32[]', space=smem, size = 0x4, offset = 0x4, fixed_abs, tag = 'smem constant byte address 0x4 - core index']
  #allocation1 [shape = 'u32[72,128]{1,0:T(1,128)}', space=vmem, size = 0x9000, scoped, tag = 'internal scratch']
  %s0 = inlined_call_operand.vmem [shape: f32[2,4,256], index: 0, kind: input, shape index: {}]
  %s1 = inlined_call_operand.vmem [shape: f32[16,36], index: 1, kind: input, shape index: {}]
  %s2 = inlined_call_operand.vmem [shape: f32[16,1], index: 2, kind: input, shape index: {}]
  %s3 = inlined_call_operand.vmem [shape: f32[16,144], index: 3, kind: input, shape index: {}]
  %s4 = inlined_call_operand.vmem [shape: f32[16,1], index: 4, kind: input, shape index: {}]
  %s5 = inlined_call_operand.vmem [shape: f32[32,144], index: 5, kind: input, shape index: {}]
  %s6 = inlined_call_operand.vmem [shape: f32[32,1], index: 6, kind: input, shape index: {}]
  %s7 = inlined_call_operand.vmem [shape: f32[32,288], index: 7, kind: input, shape index: {}]
  %s8 = inlined_call_operand.vmem [shape: f32[32,1], index: 8, kind: input, shape index: {}]
  %s9 = inlined_call_operand.vmem [shape: f32[2,32,256], index: 9, kind: output, shape index: {}]
  %s10 = sld [smem:[#allocation0]]
  $region69: #{encoder_apply.1} parent=0
    _
  %s12 = ssub.s32 1, %s10
  %s13 = scalar_select 0, %s12, %s10
  loop: start=0, step=1, limit=4
  $region2: #{encoder_apply.1} parent=0 // loop_pre_header
    _
  $region3: #{encoder_apply.1} parent=0 // loop_header
    %s15 = sphi 0, %s19
    %p16 = scmp.ge.s32.totalorder %s15, 4
    %s25 = sphi 0, %s27
    %s28 = sphi 0, %s25
    %s29 = sphi 0, %s28
    %s45 = sphi 0, %s29
    %s49 = sphi 0, %s49
    %s51 = sphi 0, %s49
    %s52 = sphi 0, %s51
    %s66 = sphi 0, %s52
    %s70 = sphi 0, %s70
    %s72 = sphi 0, %s70
    %s73 = sphi 0, %s72
    %s87 = sphi 0, %s73
    %s91 = sphi 0, %s91
    %s93 = sphi 0, %s91
    %s94 = sphi 0, %s93
    %s108 = sphi 0, %s94
    %s112 = sphi 0, %s112
    %s114 = sphi 0, %s112
    %s115 = sphi 0, %s114
    %s129 = sphi 0, %s115
    %s133 = sphi 0, %s133
    %s135 = sphi 0, %s133
    %s136 = sphi 0, %s135
    %s150 = sphi 0, %s136
    %s154 = sphi 0, %s154
    %s156 = sphi 0, %s154
    %s157 = sphi 0, %s156
    %s171 = sphi 0, %s157
    %s175 = sphi 0, %s175
    %s177 = sphi 0, %s175
    %s178 = sphi 0, %s177
    %s192 = sphi 0, %s178
    %s196 = sphi 0, %s196
    %s198 = sphi 0, %s196
    %s199 = sphi 0, %s198
    %s213 = sphi 0, %s199
    %s219 = sphi 0, %s221
    %s222 = sphi 0, %s219
    %s223 = sphi 0, %s222
    %s239 = sphi 0, %s223
  $region4: #{encoder_apply.1} parent=0 // loop_header_branch
    %18 = sbr.rel (%p16) target = $region8
  $region5: #{encoder_apply.1} parent=0 // loop_body
    %s20 = ssub.s32 %s15, 1
    %s21 = ssub.s32 %s15, 2
    %s22 = sadd.s32 %s15, 1
    %s23 = ssub.s32 %s15, %s22
    %p24 = scmp.eq.s32.totalorder %s23, 0
    %s26 = sadd.s32 %s25, 1
    %s27 = scalar_select %p24, %s25, %s26
    %p30 = pneg %p24
    %p31 = scmp.eq.s32.totalorder %s15, 1
    %p32 = por %p30, %p31
    %p33 = scmp.ne.s32.totalorder %s25, %s28
    %p34 = scmp.eq.s32.totalorder %s15, 0
    %p35 = por %p33, %p34
    %p36 = scmp.ne.s32.totalorder %s25, %s28
    %p37 = scmp.eq.s32.totalorder %s20, 1
    %p38 = por %p36, %p37
    %p39 = scmp.ne.s32.totalorder %s28, %s29
    %p40 = scmp.eq.s32.totalorder %s20, 0
    %p41 = por %p39, %p40
    %p42 = scmp.ne.s32.totalorder %s28, %s29
    %p43 = scmp.eq.s32.totalorder %s21, 1
    %p44 = por %p42, %p43
    %p46 = scmp.ne.s32.totalorder %s29, %s45
    %p47 = scmp.eq.s32.totalorder %s21, 0
    %p48 = por %p46, %p47
    %s50 = sadd.s32 %s49, 1
    %p53 = scmp.eq.s32.totalorder %s15, 1
    %p54 = scmp.ne.s32.totalorder %s49, %s51
    %p55 = scmp.eq.s32.totalorder %s15, 0
    %p56 = por %p54, %p55
    %p57 = scmp.ne.s32.totalorder %s49, %s51
    %p58 = scmp.eq.s32.totalorder %s20, 1
    %p59 = por %p57, %p58
    %p60 = scmp.ne.s32.totalorder %s51, %s52
    %p61 = scmp.eq.s32.totalorder %s20, 0
    %p62 = por %p60, %p61
    %p63 = scmp.ne.s32.totalorder %s51, %s52
    %p64 = scmp.eq.s32.totalorder %s21, 1
    %p65 = por %p63, %p64
    %p67 = scmp.ne.s32.totalorder %s52, %s66
    %p68 = scmp.eq.s32.totalorder %s21, 0
    %p69 = por %p67, %p68
    %s71 = sadd.s32 %s70, 1
    %p74 = scmp.eq.s32.totalorder %s15, 1
    %p75 = scmp.ne.s32.totalorder %s70, %s72
    %p76 = scmp.eq.s32.totalorder %s15, 0
    %p77 = por %p75, %p76
    %p78 = scmp.ne.s32.totalorder %s70, %s72
    %p79 = scmp.eq.s32.totalorder %s20, 1
    %p80 = por %p78, %p79
    %p81 = scmp.ne.s32.totalorder %s72, %s73
    %p82 = scmp.eq.s32.totalorder %s20, 0
    %p83 = por %p81, %p82
    %p84 = scmp.ne.s32.totalorder %s72, %s73
    %p85 = scmp.eq.s32.totalorder %s21, 1
    %p86 = por %p84, %p85
    %p88 = scmp.ne.s32.totalorder %s73, %s87
    %p89 = scmp.eq.s32.totalorder %s21, 0
    %p90 = por %p88, %p89
    %s92 = sadd.s32 %s91, 1
    %p95 = scmp.eq.s32.totalorder %s15, 1
    %p96 = scmp.ne.s32.totalorder %s91, %s93
    %p97 = scmp.eq.s32.totalorder %s15, 0
    %p98 = por %p96, %p97
    %p99 = scmp.ne.s32.totalorder %s91, %s93
    %p100 = scmp.eq.s32.totalorder %s20, 1
    %p101 = por %p99, %p100
    %p102 = scmp.ne.s32.totalorder %s93, %s94
    %p103 = scmp.eq.s32.totalorder %s20, 0
    %p104 = por %p102, %p103
    %p105 = scmp.ne.s32.totalorder %s93, %s94
    %p106 = scmp.eq.s32.totalorder %s21, 1
    %p107 = por %p105, %p106
    %p109 = scmp.ne.s32.totalorder %s94, %s108
    %p110 = scmp.eq.s32.totalorder %s21, 0
    %p111 = por %p109, %p110
    %s113 = sadd.s32 %s112, 1
    %p116 = scmp.eq.s32.totalorder %s15, 1
    %p117 = scmp.ne.s32.totalorder %s112, %s114
    %p118 = scmp.eq.s32.totalorder %s15, 0
    %p119 = por %p117, %p118
    %p120 = scmp.ne.s32.totalorder %s112, %s114
    %p121 = scmp.eq.s32.totalorder %s20, 1
    %p122 = por %p120, %p121
    %p123 = scmp.ne.s32.totalorder %s114, %s115
    %p124 = scmp.eq.s32.totalorder %s20, 0
    %p125 = por %p123, %p124
    %p126 = scmp.ne.s32.totalorder %s114, %s115
    %p127 = scmp.eq.s32.totalorder %s21, 1
    %p128 = por %p126, %p127
    %p130 = scmp.ne.s32.totalorder %s115, %s129
    %p131 = scmp.eq.s32.totalorder %s21, 0
    %p132 = por %p130, %p131
    %s134 = sadd.s32 %s133, 1
    %p137 = scmp.eq.s32.totalorder %s15, 1
    %p138 = scmp.ne.s32.totalorder %s133, %s135
    %p139 = scmp.eq.s32.totalorder %s15, 0
    %p140 = por %p138, %p139
    %p141 = scmp.ne.s32.totalorder %s133, %s135
    %p142 = scmp.eq.s32.totalorder %s20, 1
    %p143 = por %p141, %p142
    %p144 = scmp.ne.s32.totalorder %s135, %s136
    %p145 = scmp.eq.s32.totalorder %s20, 0
    %p146 = por %p144, %p145
    %p147 = scmp.ne.s32.totalorder %s135, %s136
    %p148 = scmp.eq.s32.totalorder %s21, 1
    %p149 = por %p147, %p148
    %p151 = scmp.ne.s32.totalorder %s136, %s150
    %p152 = scmp.eq.s32.totalorder %s21, 0
    %p153 = por %p151, %p152
    %s155 = sadd.s32 %s154, 1
    %p158 = scmp.eq.s32.totalorder %s15, 1
    %p159 = scmp.ne.s32.totalorder %s154, %s156
    %p160 = scmp.eq.s32.totalorder %s15, 0
    %p161 = por %p159, %p160
    %p162 = scmp.ne.s32.totalorder %s154, %s156
    %p163 = scmp.eq.s32.totalorder %s20, 1
    %p164 = por %p162, %p163
    %p165 = scmp.ne.s32.totalorder %s156, %s157
    %p166 = scmp.eq.s32.totalorder %s20, 0
    %p167 = por %p165, %p166
    %p168 = scmp.ne.s32.totalorder %s156, %s157
    %p169 = scmp.eq.s32.totalorder %s21, 1
    %p170 = por %p168, %p169
    %p172 = scmp.ne.s32.totalorder %s157, %s171
    %p173 = scmp.eq.s32.totalorder %s21, 0
    %p174 = por %p172, %p173
    %s176 = sadd.s32 %s175, 1
    %p179 = scmp.eq.s32.totalorder %s15, 1
    %p180 = scmp.ne.s32.totalorder %s175, %s177
    %p181 = scmp.eq.s32.totalorder %s15, 0
    %p182 = por %p180, %p181
    %p183 = scmp.ne.s32.totalorder %s175, %s177
    %p184 = scmp.eq.s32.totalorder %s20, 1
    %p185 = por %p183, %p184
    %p186 = scmp.ne.s32.totalorder %s177, %s178
    %p187 = scmp.eq.s32.totalorder %s20, 0
    %p188 = por %p186, %p187
    %p189 = scmp.ne.s32.totalorder %s177, %s178
    %p190 = scmp.eq.s32.totalorder %s21, 1
    %p191 = por %p189, %p190
    %p193 = scmp.ne.s32.totalorder %s178, %s192
    %p194 = scmp.eq.s32.totalorder %s21, 0
    %p195 = por %p193, %p194
    %s197 = sadd.s32 %s196, 1
    %p200 = scmp.eq.s32.totalorder %s15, 1
    %p201 = scmp.ne.s32.totalorder %s196, %s198
    %p202 = scmp.eq.s32.totalorder %s15, 0
    %p203 = por %p201, %p202
    %p204 = scmp.ne.s32.totalorder %s196, %s198
    %p205 = scmp.eq.s32.totalorder %s20, 1
    %p206 = por %p204, %p205
    %p207 = scmp.ne.s32.totalorder %s198, %s199
    %p208 = scmp.eq.s32.totalorder %s20, 0
    %p209 = por %p207, %p208
    %p210 = scmp.ne.s32.totalorder %s198, %s199
    %p211 = scmp.eq.s32.totalorder %s21, 1
    %p212 = por %p210, %p211
    %p214 = scmp.ne.s32.totalorder %s199, %s213
    %p215 = scmp.eq.s32.totalorder %s21, 0
    %p216 = por %p214, %p215
    %s217 = ssub.s32 %s15, %s22
    %p218 = scmp.eq.s32.totalorder %s217, 0
    %s220 = sadd.s32 %s219, 1
    %s221 = scalar_select %p218, %s219, %s220
    %p224 = pneg %p218
    %p225 = scmp.eq.s32.totalorder %s15, 1
    %p226 = por %p224, %p225
    %p227 = scmp.ne.s32.totalorder %s219, %s222
    %p228 = scmp.eq.s32.totalorder %s15, 0
    %p229 = por %p227, %p228
    %p230 = scmp.ne.s32.totalorder %s219, %s222
    %p231 = scmp.eq.s32.totalorder %s20, 1
    %p232 = por %p230, %p231
    %p233 = scmp.ne.s32.totalorder %s222, %s223
    %p234 = scmp.eq.s32.totalorder %s20, 0
    %p235 = por %p233, %p234
    %p236 = scmp.ne.s32.totalorder %s222, %s223
    %p237 = scmp.eq.s32.totalorder %s21, 1
    %p238 = por %p236, %p237
    %p240 = scmp.ne.s32.totalorder %s223, %s239
    %p241 = scmp.eq.s32.totalorder %s21, 0
    %p242 = por %p240, %p241
    %p243 = scmp.le.s32.totalorder 1, %s15
    %p244 = scmp.lt.s32.totalorder %s15, 3
    %p245 = pnand %p243, %p244
    %p246 = pneg %p245
    // Predicated region
    $region9: #{encoder_apply.1} parent=5 // pred_check
      _
    $region10: #{encoder_apply.1} parent=5 // pred_check_branch
      %248 = sbr.rel (%p245) target = $region12
    $region11: #{encoder_apply.1} parent=5 // pred_region
      %s249 = ssub.s32 %s15, 1
      // Predicated region
      $region13: #{encoder_apply.1} parent=11 // pred_check
        %p250 = pneg %p62
      $region14: #{encoder_apply.1} parent=11 // pred_check_branch
        %252 = sbr.rel (%p250) target = $region16
      $region15: #{encoder_apply.1} parent=11 // pred_region
        _
      $region16: #{encoder_apply.1} parent=11 // pred_fallthru
        _
      // Predicated region
      $region17: #{encoder_apply.1} parent=11 // pred_check
        %p253 = pneg %p83
      $region18: #{encoder_apply.1} parent=11 // pred_check_branch
        %255 = sbr.rel (%p253) target = $region20
      $region19: #{encoder_apply.1} parent=11 // pred_region
        _
      $region20: #{encoder_apply.1} parent=11 // pred_fallthru
        _
      // Predicated region
      $region21: #{encoder_apply.1} parent=11 // pred_check
        %p256 = pneg %p104
      $region22: #{encoder_apply.1} parent=11 // pred_check_branch
        %258 = sbr.rel (%p256) target = $region24
      $region23: #{encoder_apply.1} parent=11 // pred_region
        _
      $region24: #{encoder_apply.1} parent=11 // pred_fallthru
        _
      // Predicated region
      $region25: #{encoder_apply.1} parent=11 // pred_check
        %p259 = pneg %p125
      $region26: #{encoder_apply.1} parent=11 // pred_check_branch
        %261 = sbr.rel (%p259) target = $region28
      $region27: #{encoder_apply.1} parent=11 // pred_region
        _
      $region28: #{encoder_apply.1} parent=11 // pred_fallthru
        _
      // Predicated region
      $region29: #{encoder_apply.1} parent=11 // pred_check
        %p262 = pneg %p146
      $region30: #{encoder_apply.1} parent=11 // pred_check_branch
        %264 = sbr.rel (%p262) target = $region32
      $region31: #{encoder_apply.1} parent=11 // pred_region
        _
      $region32: #{encoder_apply.1} parent=11 // pred_fallthru
        _
      // Predicated region
      $region33: #{encoder_apply.1} parent=11 // pred_check
        %p265 = pneg %p167
      $region34: #{encoder_apply.1} parent=11 // pred_check_branch
        %267 = sbr.rel (%p265) target = $region36
      $region35: #{encoder_apply.1} parent=11 // pred_region
        _
      $region36: #{encoder_apply.1} parent=11 // pred_fallthru
        _
      // Predicated region
      $region37: #{encoder_apply.1} parent=11 // pred_check
        %p268 = pneg %p188
      $region38: #{encoder_apply.1} parent=11 // pred_check_branch
        %270 = sbr.rel (%p268) target = $region40
      $region39: #{encoder_apply.1} parent=11 // pred_region
        _
      $region40: #{encoder_apply.1} parent=11 // pred_fallthru
        _
      // Predicated region
      $region41: #{encoder_apply.1} parent=11 // pred_check
        %p271 = pneg %p209
      $region42: #{encoder_apply.1} parent=11 // pred_check_branch
        %273 = sbr.rel (%p271) target = $region44
      $region43: #{encoder_apply.1} parent=11 // pred_region
        _
      $region44: #{encoder_apply.1} parent=11 // pred_fallthru
        _
    $region12: #{encoder_apply.1} parent=5 // pred_fallthru
      _
    %p274 = scmp.lt.s32.totalorder %s15, 2
    // Predicated region
    $region45: #{encoder_apply.1} parent=5 // pred_check
      %p275 = pneg %p274
    $region46: #{encoder_apply.1} parent=5 // pred_check_branch
      %277 = sbr.rel (%p275) target = $region48
    $region47: #{encoder_apply.1} parent=5 // pred_region
      // Predicated region
      $region49: #{encoder_apply.1} parent=47 // pred_check
        %p278 = pneg %p35
      $region50: #{encoder_apply.1} parent=47 // pred_check_branch
        %280 = sbr.rel (%p278) target = $region52
      $region51: #{encoder_apply.1} parent=47 // pred_region
        %p281 = scmp.lt.s32.totalorder %s15, 1
        %s282 = scalar_select %p281, %s15, 1
        %s283 = smul.addr %s282, 2
        %s284 = smul.addr %s283, 4
        %s285 = scalar_lea.vmem %s0, %s284
      $region52: #{encoder_apply.1} parent=47 // pred_fallthru
        _
    $region48: #{encoder_apply.1} parent=5 // pred_fallthru
      _
    %p286 = scmp.le.s32.totalorder 1, %s15
    %p287 = scmp.lt.s32.totalorder %s15, 3
    %p288 = pnand %p286, %p287
    %p289 = pneg %p288
    // Predicated region
    $region53: #{encoder_apply.1} parent=5 // pred_check
      _
    $region54: #{encoder_apply.1} parent=5 // pred_check_branch
      %291 = sbr.rel (%p288) target = $region56
    $region55: #{encoder_apply.1} parent=5 // pred_region
      %s292 = ssub.s32 %s15, 1
      %p293 = scmp.lt.s32.totalorder %s20, 1
      %s294 = scalar_select %p293, %s20, 1
      %s295 = smul.addr %s294, 2
      %s296 = smul.addr %s295, 4
      %s297 = scalar_lea.vmem %s0, %s296
      %p298 = pneg %p41
      %p299 = pneg %p38
      %p300 = pneg %p62
      %p301 = pneg %p59
      %p302 = pneg %p83
      %p303 = pneg %p80
      %p304 = pneg %p104
      %p305 = pneg %p101
      %p306 = pneg %p125
      %p307 = pneg %p122
      %p308 = pneg %p146
      %p309 = pneg %p143
      %p310 = pneg %p167
      %p311 = pneg %p164
      %p312 = pneg %p188
      %p313 = pneg %p185
      %p314 = pneg %p209
      %p315 = pneg %p206
      %p316 = pneg %p235
      %p317 = pneg %p232
      %p318 = scmp.lt.s32.totalorder %s20, 1
      %s319 = scalar_select %p318, %s20, 1
      %s320 = smul.addr %s319, 8
      %s321 = smul.addr %s320, 8
      %s322 = scalar_lea.vmem %s9, %s321
      %p323 = scmp.lt.s32.totalorder %s20, 1
      %s324 = scalar_select %p323, %s20, 1
      %s325 = smul.addr %s324, 2
      %s326 = smul.addr %s325, 4
      %s327 = scalar_lea.vmem %s0, %s326
      %p328 = scmp.lt.s32.totalorder %s20, 1
      %s329 = scalar_select %p328, %s20, 1
      %s330 = smul.addr %s329, 8
      %s331 = smul.addr %s330, 8
      %s332 = scalar_lea.vmem %s9, %s331
      %v333 = vlaneseq
      %v334 = vand.u32 %v333, 127
      %v335 = vadd.s32 %v334, 128
      %v336 = vand.u32 %v334, 15
      %v337 = vand.u32 %v335, 15
      %vm338 = vcmp.ge.s32.totalorder %v336, 1
      %vm339 = vcmp.ge.s32.totalorder %v337, 1
      %v340 = vsel %vm338, 1, 0
      %v341 = vsel %vm339, 1, 0
      %v342 = vcvt.s32.f32 %v340
      %v343 = vcvt.s32.f32 %v341
      %vm344 = vcmp.lt.s32.totalorder %v336, 15
      %vm345 = vcmp.lt.s32.totalorder %v337, 15
      %v346 = vsel %vm344, 1, 0
      %v347 = vsel %vm345, 1, 0
      %v348 = vcvt.s32.f32 %v346
      %v349 = vcvt.s32.f32 %v347
      %vm350 = vcmp.ge.s32.totalorder %v334, 16
      %vm351 = vcmp.ge.s32.totalorder %v335, 16
      %v352 = vsel %vm350, 1, 0
      %v353 = vsel %vm351, 1, 0
      %v354 = vcvt.s32.f32 %v352
      %v355 = vcvt.s32.f32 %v353
      %vm356 = vcmp.lt.s32.totalorder %v334, 240
      %vm357 = vcmp.lt.s32.totalorder %v335, 240
      %v358 = vsel %vm356, 1, 0
      %v359 = vsel %vm357, 1, 0
      %v360 = vcvt.s32.f32 %v358
      %v361 = vcvt.s32.f32 %v359
      %v362 = vmul.f32 %v354, %v342
      %v363 = vmul.f32 %v355, %v343
      %v364 = vmul.f32 %v354, %v348
      %v365 = vmul.f32 %v355, %v349
      %v366 = vmul.f32 %v360, %v342
      %v367 = vmul.f32 %v361, %v343
      %v368 = vmul.f32 %v360, %v348
      %v369 = vmul.f32 %v361, %v349
      %v370 = vld [vmem:[%s327] sm:$0xff]
      %372 = vst [vmem:[#allocation1] ss:$2 sm:$0xff] %v370
      %v373 = vld.sshfl [vmem:[#allocation1] sm:$0xff pattern:$0x75316420]
      %v374 = vld.sshfl [vmem:[#allocation1 + $0x8] sm:$0xff pattern:$0x75316420]
      %377 = vrot.lane.b32.xlu0 %v373, 17
      %v378 = vpop.permute.xlu0 %377
      %379 = vrot.lane.b32.xlu0 %v374, 17
      %v380 = vpop.permute.xlu0 %379
      %vm381 = vcmp.lt.s32.totalorder %v334, 17
      %v382 = vsel %vm381, %v378, %v380
      %v383 = vsel %vm381, %v380, %v378
      %v384 = vmul.f32 %v383, %v362
      %v385 = vmul.f32 %v382, %v363
      %386 = vst [vmem:[#allocation1] ss:$2 sm:$0xff] %v370
      %v387 = vld.sshfl [vmem:[#allocation1] sm:$0xff pattern:$0x75316420]
      %v388 = vld.sshfl [vmem:[#allocation1 + $0x8] sm:$0xff pattern:$0x75316420]
      %391 = vrot.lane.b32.xlu0 %v387, 16
      %v392 = vpop.permute.xlu0 %391
      %393 = vrot.lane.b32.xlu0 %v388, 16
      %v394 = vpop.permute.xlu0 %393
      %vm395 = vcmp.lt.s32.totalorder %v334, 16
      %v396 = vsel %vm395, %v392, %v394
      %v397 = vsel %vm395, %v394, %v392
      %v398 = vmul.f32 %v397, %v354
      %v399 = vmul.f32 %v396, %v355
      %400 = vst [vmem:[#allocation1] ss:$2 sm:$0xff] %v370
      %v401 = vld.sshfl [vmem:[#allocation1] sm:$0xff pattern:$0x75316420]
      %v402 = vld.sshfl [vmem:[#allocation1 + $0x8] sm:$0xff pattern:$0x75316420]
      %405 = vrot.lane.b32.xlu0 %v401, 15
      %v406 = vpop.permute.xlu0 %405
      %407 = vrot.lane.b32.xlu0 %v402, 15
      %v408 = vpop.permute.xlu0 %407
      %vm409 = vcmp.lt.s32.totalorder %v334, 15
      %v410 = vsel %vm409, %v406, %v408
      %v411 = vsel %vm409, %v408, %v406
      %v412 = vmul.f32 %v411, %v364
      %v413 = vmul.f32 %v410, %v365
      %414 = vst [vmem:[#allocation1] ss:$2 sm:$0xff] %v370
      %v415 = vld.sshfl [vmem:[#allocation1] sm:$0xff pattern:$0x75316420]
      %v416 = vld.sshfl [vmem:[#allocation1 + $0x8] sm:$0xff pattern:$0x75316420]
      %419 = vrot.lane.b32.xlu0 %v415, 1
      %v420 = vpop.permute.xlu0 %419
      %421 = vrot.lane.b32.xlu0 %v416, 1
      %v422 = vpop.permute.xlu0 %421
      %vm423 = vcmp.lt.s32.totalorder %v334, 1
      %v424 = vsel %vm423, %v420, %v422
      %v425 = vsel %vm423, %v422, %v420
      %v426 = vmul.f32 %v425, %v342
      %v427 = vmul.f32 %v424, %v343
      %428 = vst [vmem:[#allocation1] ss:$2 sm:$0xff] %v370
      %v429 = vld.sshfl [vmem:[#allocation1] sm:$0xff pattern:$0x75316420]
      %v430 = vld.sshfl [vmem:[#allocation1 + $0x8] sm:$0xff pattern:$0x75316420]
      %433 = vrot.lane.b32.xlu0 %v429, 127
      %v434 = vpop.permute.xlu0 %433
      %435 = vrot.lane.b32.xlu0 %v430, 127
      %v436 = vpop.permute.xlu0 %435
      %vm437 = vcmp.lt.s32.totalorder %v334, 127
      %v438 = vsel %vm437, %v434, %v436
      %v439 = vsel %vm437, %v436, %v434
      %v440 = vmul.f32 %v438, %v348
      %v441 = vmul.f32 %v439, %v349
      %442 = vst [vmem:[#allocation1] ss:$2 sm:$0xff] %v370
      %v443 = vld.sshfl [vmem:[#allocation1] sm:$0xff pattern:$0x75316420]
      %v444 = vld.sshfl [vmem:[#allocation1 + $0x8] sm:$0xff pattern:$0x75316420]
      %447 = vrot.lane.b32.xlu0 %v443, 113
      %v448 = vpop.permute.xlu0 %447
      %449 = vrot.lane.b32.xlu0 %v444, 113
      %v450 = vpop.permute.xlu0 %449
      %vm451 = vcmp.lt.s32.totalorder %v334, 113
      %v452 = vsel %vm451, %v448, %v450
      %v453 = vsel %vm451, %v450, %v448
      %v454 = vmul.f32 %v452, %v366
      %v455 = vmul.f32 %v453, %v367
      %456 = vst [vmem:[#allocation1] ss:$2 sm:$0xff] %v370
      %v457 = vld.sshfl [vmem:[#allocation1] sm:$0xff pattern:$0x75316420]
      %v458 = vld.sshfl [vmem:[#allocation1 + $0x8] sm:$0xff pattern:$0x75316420]
      %461 = vrot.lane.b32.xlu0 %v457, 112
      %v462 = vpop.permute.xlu0 %461
      %463 = vrot.lane.b32.xlu0 %v458, 112
      %v464 = vpop.permute.xlu0 %463
      %vm465 = vcmp.lt.s32.totalorder %v334, 112
      %v466 = vsel %vm465, %v462, %v464
      %v467 = vsel %vm465, %v464, %v462
      %v468 = vmul.f32 %v466, %v360
      %v469 = vmul.f32 %v467, %v361
      %470 = vst [vmem:[#allocation1] ss:$2 sm:$0xff] %v370
      %v471 = vld.sshfl [vmem:[#allocation1] sm:$0xff pattern:$0x75316420]
      %v472 = vld.sshfl [vmem:[#allocation1 + $0x8] sm:$0xff pattern:$0x75316420]
      %475 = vrot.lane.b32.xlu0 %v471, 111
      %v476 = vpop.permute.xlu0 %475
      %477 = vrot.lane.b32.xlu0 %v472, 111
      %v478 = vpop.permute.xlu0 %477
      %vm479 = vcmp.lt.s32.totalorder %v334, 111
      %v480 = vsel %vm479, %v476, %v478
      %v481 = vsel %vm479, %v478, %v476
      %v482 = vmul.f32 %v480, %v368
      %v483 = vmul.f32 %v481, %v369
      %v486 = vrot.slane %v398, 4
      %v487 = vrot.slane %v399, 4
      %v492 = vrot.slane %v426, 4
      %v493 = vrot.slane %v427, 4
      %496 = vst [vmem:[#allocation1] ss:$2 sm:$0xff] %v370
      %v497 = vld.sshfl [vmem:[#allocation1] sm:$0xff pattern:$0x75316420]
      %v498 = vld.sshfl [vmem:[#allocation1 + $0x8] sm:$0xff pattern:$0x75316420]
      %v503 = vrot.slane %v440, 4
      %v504 = vrot.slane %v441, 4
      %v509 = vrot.slane %v468, 4
      %v510 = vrot.slane %v469, 4
      %vm513 = vcmask 1043456
      %v514 = vsel %vm513, %v384, %v486
      %v515 = vsel %vm513, %v385, %v487
      %v516 = vsel %vm513, %v412, %v492
      %v517 = vsel %vm513, %v413, %v493
      %v518 = vsel %vm513, %v497, %v503
      %v519 = vsel %vm513, %v498, %v504
      %v520 = vsel %vm513, %v454, %v509
      %v521 = vsel %vm513, %v455, %v510
      %v522 = vld [vmem:[%s1] sm:$0xff]
      %v523 = vld [vmem:[%s1 + $0x8] sm:$0xff]
      %v524 = vld [vmem:[%s2] sm:$0xff]
      %v525 = vld [vmem:[%s2 + $0x8] sm:$0xff]
      %527 = vset.pattern.permute.xlu0 0
      %528 = vperm.xlu0 %527, %v524
      %v529 = vpop.permute.xlu0 %528
      %532 = vset.pattern.permute.xlu0 0
      %533 = vperm.xlu0 %532, %v525
      %v534 = vpop.permute.xlu0 %533
      %vm536 = vcmask 293888
      %v538 = vsel %vm536, %v522, 0
      %v541 = vsel %vm536, %v523, 0
      %v544 = vsel %vm513, %v482, 0
      %v547 = vsel %vm513, %v483, 0
      %549 = vmatpush.msra.mxu0 0.0
      %550 = vmatpush.msra.mxu0 0.0
      %551 = vmatpush.msra.mxu0 0.0
      %552 = vmatpush.msra.mxu0 0.0
      %553 = vmatpush.msra.mxu0 0.0
      %554 = vmatpush.msra.mxu0 0.0
      %555 = vmatpush.msra.mxu0 0.0
      %556 = vmatpush.msra.mxu0 0.0
      %557 = vmatpush.msra.mxu0 0.0
      %558 = vmatpush.msra.mxu0 0.0
      %559 = vmatpush.msra.mxu0 0.0
      %560 = vmatpush.msra.mxu0 %v544
      %561 = vmatpush.msra.mxu0 %v520
      %562 = vmatpush.msra.mxu0 %v518
      %563 = vmatpush.msra.mxu0 %v516
      %564 = vmatpush.msra.mxu0 %v514
      %565 = vmatmul.f32.gmra.mxu0 %v538
      %v566 = vpop.f32.mrf.mxu0
      %v567 = vadd.f32 %v529, %v566
      %568 = vmatmul.f32.gmra.mxu0 %v541
      %v569 = vpop.f32.mrf.mxu0
      %v570 = vadd.f32 %v534, %v569
      %571 = vdwg.mxu0
      %572 = vmatpush.msra.mxu0 0.0
      %573 = vmatpush.msra.mxu0 0.0
      %574 = vmatpush.msra.mxu0 0.0
      %575 = vmatpush.msra.mxu0 0.0
      %576 = vmatpush.msra.mxu0 0.0
      %577 = vmatpush.msra.mxu0 0.0
      %578 = vmatpush.msra.mxu0 0.0
      %579 = vmatpush.msra.mxu0 0.0
      %580 = vmatpush.msra.mxu0 0.0
      %581 = vmatpush.msra.mxu0 0.0
      %582 = vmatpush.msra.mxu0 0.0
      %583 = vmatpush.msra.mxu0 %v547
      %584 = vmatpush.msra.mxu0 %v521
      %585 = vmatpush.msra.mxu0 %v519
      %586 = vmatpush.msra.mxu0 %v517
      %587 = vmatpush.msra.mxu0 %v515
      %588 = vmatmul.f32.gmra.mxu0 %v538
      %v589 = vpop.f32.mrf.mxu0
      %v590 = vadd.f32 %v529, %v589
      %591 = vmatmul.f32.gmra.mxu0 %v541
      %v592 = vpop.f32.mrf.mxu0
      %v593 = vadd.f32 %v534, %v592
      %594 = vdwg.mxu0
      %v595 = vmax.f32 %v567, 0.0
      %v596 = vmax.f32 %v590, 0.0
      %v597 = vmax.f32 %v570, 0.0
      %v598 = vmax.f32 %v593, 0.0
      %599 = vrot.lane.b32.xlu0 %v595, 17
      %v600 = vpop.permute.xlu0 %599
      %601 = vrot.lane.b32.xlu0 %v597, 17
      %v602 = vpop.permute.xlu0 %601
      %603 = vrot.lane.b32.xlu0 %v596, 17
      %v604 = vpop.permute.xlu0 %603
      %605 = vrot.lane.b32.xlu0 %v598, 17
      %v606 = vpop.permute.xlu0 %605
      %v607 = vsel %vm381, %v600, %v604
      %v608 = vsel %vm381, %v602, %v606
      %v609 = vsel %vm381, %v604, %v600
      %v610 = vsel %vm381, %v606, %v602
      %v611 = vmul.f32 %v609, %v362
      %v612 = vmul.f32 %v607, %v363
      %v613 = vmul.f32 %v610, %v362
      %v614 = vmul.f32 %v608, %v363
      %615 = vrot.lane.b32.xlu0 %v595, 16
      %v616 = vpop.permute.xlu0 %615
      %617 = vrot.lane.b32.xlu0 %v597, 16
      %v618 = vpop.permute.xlu0 %617
      %619 = vrot.lane.b32.xlu0 %v596, 16
      %v620 = vpop.permute.xlu0 %619
      %621 = vrot.lane.b32.xlu0 %v598, 16
      %v622 = vpop.permute.xlu0 %621
      %v623 = vsel %vm395, %v616, %v620
      %v624 = vsel %vm395, %v618, %v622
      %v625 = vsel %vm395, %v620, %v616
      %v626 = vsel %vm395, %v622, %v618
      %v627 = vmul.f32 %v625, %v354
      %v628 = vmul.f32 %v623, %v355
      %v629 = vmul.f32 %v626, %v354
      %v630 = vmul.f32 %v624, %v355
      %631 = vrot.lane.b32.xlu0 %v595, 15
      %v632 = vpop.permute.xlu0 %631
      %633 = vrot.lane.b32.xlu0 %v597, 15
      %v634 = vpop.permute.xlu0 %633
      %635 = vrot.lane.b32.xlu0 %v596, 15
      %v636 = vpop.permute.xlu0 %635
      %637 = vrot.lane.b32.xlu0 %v598, 15
      %v638 = vpop.permute.xlu0 %637
      %v639 = vsel %vm409, %v632, %v636
      %v640 = vsel %vm409, %v634, %v638
      %v641 = vsel %vm409, %v636, %v632
      %v642 = vsel %vm409, %v638, %v634
      %v643 = vmul.f32 %v641, %v364
      %v644 = vmul.f32 %v639, %v365
      %v645 = vmul.f32 %v642, %v364
      %v646 = vmul.f32 %v640, %v365
      %647 = vrot.lane.b32.xlu0 %v595, 1
      %v648 = vpop.permute.xlu0 %647
      %649 = vrot.lane.b32.xlu0 %v597, 1
      %v650 = vpop.permute.xlu0 %649
      %651 = vrot.lane.b32.xlu0 %v596, 1
      %v652 = vpop.permute.xlu0 %651
      %653 = vrot.lane.b32.xlu0 %v598, 1
      %v654 = vpop.permute.xlu0 %653
      %v655 = vsel %vm423, %v648, %v652
      %v656 = vsel %vm423, %v650, %v654
      %v657 = vsel %vm423, %v652, %v648
      %v658 = vsel %vm423, %v654, %v650
      %v659 = vmul.f32 %v657, %v342
      %v660 = vmul.f32 %v655, %v343
      %v661 = vmul.f32 %v658, %v342
      %v662 = vmul.f32 %v656, %v343
      %663 = vrot.lane.b32.xlu0 %v595, 127
      %v664 = vpop.permute.xlu0 %663
      %665 = vrot.lane.b32.xlu0 %v597, 127
      %v666 = vpop.permute.xlu0 %665
      %667 = vrot.lane.b32.xlu0 %v596, 127
      %v668 = vpop.permute.xlu0 %667
      %669 = vrot.lane.b32.xlu0 %v598, 127
      %v670 = vpop.permute.xlu0 %669
      %v671 = vsel %vm437, %v664, %v668
      %v672 = vsel %vm437, %v666, %v670
      %v673 = vsel %vm437, %v668, %v664
      %v674 = vsel %vm437, %v670, %v666
      %v675 = vmul.f32 %v671, %v348
      %v676 = vmul.f32 %v673, %v349
      %v677 = vmul.f32 %v672, %v348
      %v678 = vmul.f32 %v674, %v349
      %679 = vrot.lane.b32.xlu0 %v595, 113
      %v680 = vpop.permute.xlu0 %679
      %681 = vrot.lane.b32.xlu0 %v597, 113
      %v682 = vpop.permute.xlu0 %681
      %683 = vrot.lane.b32.xlu0 %v596, 113
      %v684 = vpop.permute.xlu0 %683
      %685 = vrot.lane.b32.xlu0 %v598, 113
      %v686 = vpop.permute.xlu0 %685
      %v687 = vsel %vm451, %v680, %v684
      %v688 = vsel %vm451, %v682, %v686
      %v689 = vsel %vm451, %v684, %v680
      %v690 = vsel %vm451, %v686, %v682
      %v691 = vmul.f32 %v687, %v366
      %v692 = vmul.f32 %v689, %v367
      %v693 = vmul.f32 %v688, %v366
      %v694 = vmul.f32 %v690, %v367
      %695 = vrot.lane.b32.xlu0 %v595, 112
      %v696 = vpop.permute.xlu0 %695
      %697 = vrot.lane.b32.xlu0 %v597, 112
      %v698 = vpop.permute.xlu0 %697
      %699 = vrot.lane.b32.xlu0 %v596, 112
      %v700 = vpop.permute.xlu0 %699
      %701 = vrot.lane.b32.xlu0 %v598, 112
      %v702 = vpop.permute.xlu0 %701
      %v703 = vsel %vm465, %v696, %v700
      %v704 = vsel %vm465, %v698, %v702
      %v705 = vsel %vm465, %v700, %v696
      %v706 = vsel %vm465, %v702, %v698
      %v707 = vmul.f32 %v703, %v360
      %v708 = vmul.f32 %v705, %v361
      %v709 = vmul.f32 %v704, %v360
      %v710 = vmul.f32 %v706, %v361
      %711 = vrot.lane.b32.xlu0 %v595, 111
      %v712 = vpop.permute.xlu0 %711
      %713 = vrot.lane.b32.xlu0 %v597, 111
      %v714 = vpop.permute.xlu0 %713
      %715 = vrot.lane.b32.xlu0 %v596, 111
      %v716 = vpop.permute.xlu0 %715
      %717 = vrot.lane.b32.xlu0 %v598, 111
      %v718 = vpop.permute.xlu0 %717
      %v719 = vsel %vm479, %v712, %v716
      %v720 = vsel %vm479, %v714, %v718
      %v721 = vsel %vm479, %v716, %v712
      %v722 = vsel %vm479, %v718, %v714
      %v723 = vmul.f32 %v719, %v368
      %v724 = vmul.f32 %v721, %v369
      %v725 = vmul.f32 %v720, %v368
      %v726 = vmul.f32 %v722, %v369
      %v727 = vld [vmem:[%s3] sm:$0xff]
      %v728 = vld [vmem:[%s3 + $0x8] sm:$0xff]
      %v729 = vld [vmem:[%s3 + $0x10] sm:$0xff]
      %v730 = vld [vmem:[%s3 + $0x18] sm:$0xff]
      %v731 = vld [vmem:[%s4] sm:$0xff]
      %v732 = vld [vmem:[%s4 + $0x8] sm:$0xff]
      %734 = vset.pattern.permute.xlu0 0
      %735 = vperm.xlu0 %734, %v731
      %v736 = vpop.permute.xlu0 %735
      %739 = vset.pattern.permute.xlu0 0
      %740 = vperm.xlu0 %739, %v732
      %v741 = vpop.permute.xlu0 %740
      %vm743 = vcmask 130048
      %v745 = vsel %vm743, %v728, 0
      %v748 = vsel %vm743, %v730, 0
      %750 = vmatpush.msra.mxu0 %v709
      %751 = vmatpush.msra.mxu0 %v707
      %752 = vmatpush.msra.mxu0 %v693
      %753 = vmatpush.msra.mxu0 %v691
      %754 = vmatpush.msra.mxu0 %v677
      %755 = vmatpush.msra.mxu0 %v675
      %756 = vmatpush.msra.mxu0 %v597
      %757 = vmatpush.msra.mxu0 %v595
      %758 = vmatpush.msra.mxu0 %v661
      %759 = vmatpush.msra.mxu0 %v659
      %760 = vmatpush.msra.mxu0 %v645
      %761 = vmatpush.msra.mxu0 %v643
      %762 = vmatpush.msra.mxu0 %v629
      %763 = vmatpush.msra.mxu0 %v627
      %764 = vmatpush.msra.mxu0 %v613
      %765 = vmatpush.msra.mxu0 %v611
      %766 = vmatmul.f32.gmra.mxu0 %v727
      %v767 = vpop.f32.mrf.mxu0
      %v768 = vadd.f32 %v736, %v767
      %769 = vmatmul.f32.gmra.mxu0 %v729
      %v770 = vpop.f32.mrf.mxu0
      %v771 = vadd.f32 %v741, %v770
      %772 = vdwg.mxu0
      %773 = vmatpush.msra.mxu0 0.0
      %774 = vmatpush.msra.mxu0 0.0
      %775 = vmatpush.msra.mxu0 0.0
      %776 = vmatpush.msra.mxu0 0.0
      %777 = vmatpush.msra.mxu0 0.0
      %778 = vmatpush.msra.mxu0 0.0
      %779 = vmatpush.msra.mxu0 0.0
      %780 = vmatpush.msra.mxu0 0.0
      %781 = vmatpush.msra.mxu0 0.0
      %782 = vmatpush.msra.mxu0 0.0
      %783 = vmatpush.msra.mxu0 0.0
      %784 = vmatpush.msra.mxu0 0.0
      %785 = vmatpush.msra.mxu0 0.0
      %786 = vmatpush.msra.mxu0 0.0
      %787 = vmatpush.msra.mxu0 %v725
      %788 = vmatpush.msra.mxu0 %v723
      %789 = vmatmul.f32.gmra.mxu0 %v745
      %v790 = vpop.f32.mrf.mxu0
      %v791 = vadd.f32 %v768, %v790
      %792 = vmatmul.f32.gmra.mxu0 %v748
      %v793 = vpop.f32.mrf.mxu0
      %v794 = vadd.f32 %v771, %v793
      %795 = vdwg.mxu0
      %796 = vmatpush.msra.mxu0 %v710
      %797 = vmatpush.msra.mxu0 %v708
      %798 = vmatpush.msra.mxu0 %v694
      %799 = vmatpush.msra.mxu0 %v692
      %800 = vmatpush.msra.mxu0 %v678
      %801 = vmatpush.msra.mxu0 %v676
      %802 = vmatpush.msra.mxu0 %v598
      %803 = vmatpush.msra.mxu0 %v596
      %804 = vmatpush.msra.mxu0 %v662
      %805 = vmatpush.msra.mxu0 %v660
      %806 = vmatpush.msra.mxu0 %v646
      %807 = vmatpush.msra.mxu0 %v644
      %808 = vmatpush.msra.mxu0 %v630
      %809 = vmatpush.msra.mxu0 %v628
      %810 = vmatpush.msra.mxu0 %v614
      %811 = vmatpush.msra.mxu0 %v612
      %812 = vmatmul.f32.gmra.mxu0 %v727
      %v813 = vpop.f32.mrf.mxu0
      %v814 = vadd.f32 %v736, %v813
      %815 = vmatmul.f32.gmra.mxu0 %v729
      %v816 = vpop.f32.mrf.mxu0
      %v817 = vadd.f32 %v741, %v816
      %818 = vdwg.mxu0
      %819 = vmatpush.msra.mxu0 0.0
      %820 = vmatpush.msra.mxu0 0.0
      %821 = vmatpush.msra.mxu0 0.0
      %822 = vmatpush.msra.mxu0 0.0
      %823 = vmatpush.msra.mxu0 0.0
      %824 = vmatpush.msra.mxu0 0.0
      %825 = vmatpush.msra.mxu0 0.0
      %826 = vmatpush.msra.mxu0 0.0
      %827 = vmatpush.msra.mxu0 0.0
      %828 = vmatpush.msra.mxu0 0.0
      %829 = vmatpush.msra.mxu0 0.0
      %830 = vmatpush.msra.mxu0 0.0
      %831 = vmatpush.msra.mxu0 0.0
      %832 = vmatpush.msra.mxu0 0.0
      %833 = vmatpush.msra.mxu0 %v726
      %834 = vmatpush.msra.mxu0 %v724
      %835 = vmatmul.f32.gmra.mxu0 %v745
      %v836 = vpop.f32.mrf.mxu0
      %v837 = vadd.f32 %v814, %v836
      %838 = vmatmul.f32.gmra.mxu0 %v748
      %v839 = vpop.f32.mrf.mxu0
      %v840 = vadd.f32 %v817, %v839
      %841 = vdwg.mxu0
      %v842 = vmax.f32 %v791, 0.0
      %v843 = vmax.f32 %v837, 0.0
      %v844 = vmax.f32 %v794, 0.0
      %v845 = vmax.f32 %v840, 0.0
      %846 = vrot.lane.b32.xlu0 %v842, 17
      %v847 = vpop.permute.xlu0 %846
      %848 = vrot.lane.b32.xlu0 %v844, 17
      %v849 = vpop.permute.xlu0 %848
      %850 = vrot.lane.b32.xlu0 %v843, 17
      %v851 = vpop.permute.xlu0 %850
      %852 = vrot.lane.b32.xlu0 %v845, 17
      %v853 = vpop.permute.xlu0 %852
      %v854 = vsel %vm381, %v847, %v851
      %v855 = vsel %vm381, %v849, %v853
      %v856 = vsel %vm381, %v851, %v847
      %v857 = vsel %vm381, %v853, %v849
      %v858 = vmul.f32 %v856, %v362
      %v859 = vmul.f32 %v854, %v363
      %v860 = vmul.f32 %v857, %v362
      %v861 = vmul.f32 %v855, %v363
      %862 = vrot.lane.b32.xlu0 %v842, 16
      %v863 = vpop.permute.xlu0 %862
      %864 = vrot.lane.b32.xlu0 %v844, 16
      %v865 = vpop.permute.xlu0 %864
      %866 = vrot.lane.b32.xlu0 %v843, 16
      %v867 = vpop.permute.xlu0 %866
      %868 = vrot.lane.b32.xlu0 %v845, 16
      %v869 = vpop.permute.xlu0 %868
      %v870 = vsel %vm395, %v863, %v867
      %v871 = vsel %vm395, %v865, %v869
      %v872 = vsel %vm395, %v867, %v863
      %v873 = vsel %vm395, %v869, %v865
      %v874 = vmul.f32 %v872, %v354
      %v875 = vmul.f32 %v870, %v355
      %v876 = vmul.f32 %v873, %v354
      %v877 = vmul.f32 %v871, %v355
      %878 = vrot.lane.b32.xlu0 %v842, 15
      %v879 = vpop.permute.xlu0 %878
      %880 = vrot.lane.b32.xlu0 %v844, 15
      %v881 = vpop.permute.xlu0 %880
      %882 = vrot.lane.b32.xlu0 %v843, 15
      %v883 = vpop.permute.xlu0 %882
      %884 = vrot.lane.b32.xlu0 %v845, 15
      %v885 = vpop.permute.xlu0 %884
      %v886 = vsel %vm409, %v879, %v883
      %v887 = vsel %vm409, %v881, %v885
      %v888 = vsel %vm409, %v883, %v879
      %v889 = vsel %vm409, %v885, %v881
      %v890 = vmul.f32 %v888, %v364
      %v891 = vmul.f32 %v886, %v365
      %v892 = vmul.f32 %v889, %v364
      %v893 = vmul.f32 %v887, %v365
      %894 = vrot.lane.b32.xlu0 %v842, 1
      %v895 = vpop.permute.xlu0 %894
      %896 = vrot.lane.b32.xlu0 %v844, 1
      %v897 = vpop.permute.xlu0 %896
      %898 = vrot.lane.b32.xlu0 %v843, 1
      %v899 = vpop.permute.xlu0 %898
      %900 = vrot.lane.b32.xlu0 %v845, 1
      %v901 = vpop.permute.xlu0 %900
      %v902 = vsel %vm423, %v895, %v899
      %v903 = vsel %vm423, %v897, %v901
      %v904 = vsel %vm423, %v899, %v895
      %v905 = vsel %vm423, %v901, %v897
      %v906 = vmul.f32 %v904, %v342
      %v907 = vmul.f32 %v902, %v343
      %v908 = vmul.f32 %v905, %v342
      %v909 = vmul.f32 %v903, %v343
      %910 = vrot.lane.b32.xlu0 %v842, 127
      %v911 = vpop.permute.xlu0 %910
      %912 = vrot.lane.b32.xlu0 %v844, 127
      %v913 = vpop.permute.xlu0 %912
      %914 = vrot.lane.b32.xlu0 %v843, 127
      %v915 = vpop.permute.xlu0 %914
      %916 = vrot.lane.b32.xlu0 %v845, 127
      %v917 = vpop.permute.xlu0 %916
      %v918 = vsel %vm437, %v911, %v915
      %v919 = vsel %vm437, %v913, %v917
      %v920 = vsel %vm437, %v915, %v911
      %v921 = vsel %vm437, %v917, %v913
      %v922 = vmul.f32 %v918, %v348
      %v923 = vmul.f32 %v920, %v349
      %v924 = vmul.f32 %v919, %v348
      %v925 = vmul.f32 %v921, %v349
      %926 = vrot.lane.b32.xlu0 %v842, 113
      %v927 = vpop.permute.xlu0 %926
      %928 = vrot.lane.b32.xlu0 %v844, 113
      %v929 = vpop.permute.xlu0 %928
      %930 = vrot.lane.b32.xlu0 %v843, 113
      %v931 = vpop.permute.xlu0 %930
      %932 = vrot.lane.b32.xlu0 %v845, 113
      %v933 = vpop.permute.xlu0 %932
      %v934 = vsel %vm451, %v927, %v931
      %v935 = vsel %vm451, %v929, %v933
      %v936 = vsel %vm451, %v931, %v927
      %v937 = vsel %vm451, %v933, %v929
      %v938 = vmul.f32 %v934, %v366
      %v939 = vmul.f32 %v936, %v367
      %v940 = vmul.f32 %v935, %v366
      %v941 = vmul.f32 %v937, %v367
      %942 = vrot.lane.b32.xlu0 %v842, 112
      %v943 = vpop.permute.xlu0 %942
      %944 = vrot.lane.b32.xlu0 %v844, 112
      %v945 = vpop.permute.xlu0 %944
      %946 = vrot.lane.b32.xlu0 %v843, 112
      %v947 = vpop.permute.xlu0 %946
      %948 = vrot.lane.b32.xlu0 %v845, 112
      %v949 = vpop.permute.xlu0 %948
      %v950 = vsel %vm465, %v943, %v947
      %v951 = vsel %vm465, %v945, %v949
      %v952 = vsel %vm465, %v947, %v943
      %v953 = vsel %vm465, %v949, %v945
      %v954 = vmul.f32 %v950, %v360
      %v955 = vmul.f32 %v952, %v361
      %v956 = vmul.f32 %v951, %v360
      %v957 = vmul.f32 %v953, %v361
      %958 = vrot.lane.b32.xlu0 %v842, 111
      %v959 = vpop.permute.xlu0 %958
      %960 = vrot.lane.b32.xlu0 %v844, 111
      %v961 = vpop.permute.xlu0 %960
      %962 = vrot.lane.b32.xlu0 %v843, 111
      %v963 = vpop.permute.xlu0 %962
      %964 = vrot.lane.b32.xlu0 %v845, 111
      %v965 = vpop.permute.xlu0 %964
      %v966 = vsel %vm479, %v959, %v963
      %v967 = vsel %vm479, %v961, %v965
      %v968 = vsel %vm479, %v963, %v959
      %v969 = vsel %vm479, %v965, %v961
      %v970 = vmul.f32 %v966, %v368
      %v971 = vmul.f32 %v968, %v369
      %v972 = vmul.f32 %v967, %v368
      %v973 = vmul.f32 %v969, %v369
      %v974 = vld [vmem:[%s5] sm:$0xff]
      %v975 = vld [vmem:[%s5 + $0x8] sm:$0xff]
      %v976 = vld [vmem:[%s5 + $0x10] sm:$0xff]
      %v977 = vld [vmem:[%s5 + $0x18] sm:$0xff]
      %v978 = vld [vmem:[%s5 + $0x20] sm:$0xff]
      %v979 = vld [vmem:[%s5 + $0x28] sm:$0xff]
      %v980 = vld [vmem:[%s5 + $0x30] sm:$0xff]
      %v981 = vld [vmem:[%s5 + $0x38] sm:$0xff]
      %v982 = vld [vmem:[%s6] sm:$0xff]
      %v983 = vld [vmem:[%s6 + $0x8] sm:$0xff]
      %v984 = vld [vmem:[%s6 + $0x10] sm:$0xff]
      %v985 = vld [vmem:[%s6 + $0x18] sm:$0xff]
      %987 = vset.pattern.permute.xlu0 0
      %988 = vperm.xlu0 %987, %v982
      %v989 = vpop.permute.xlu0 %988
      %992 = vset.pattern.permute.xlu0 0
      %993 = vperm.xlu0 %992, %v983
      %v994 = vpop.permute.xlu0 %993
      %997 = vset.pattern.permute.xlu0 0
      %998 = vperm.xlu0 %997, %v984
      %v999 = vpop.permute.xlu0 %998
      %1002 = vset.pattern.permute.xlu0 0
      %1003 = vperm.xlu0 %1002, %v985
      %v1004 = vpop.permute.xlu0 %1003
      %v1007 = vsel %vm743, %v975, 0
      %v1010 = vsel %vm743, %v977, 0
      %v1013 = vsel %vm743, %v979, 0
      %v1016 = vsel %vm743, %v981, 0
      %1018 = vmatpush.msra.mxu0 %v956
      %1019 = vmatpush.msra.mxu0 %v954
      %1020 = vmatpush.msra.mxu0 %v940
      %1021 = vmatpush.msra.mxu0 %v938
      %1022 = vmatpush.msra.mxu0 %v924
      %1023 = vmatpush.msra.mxu0 %v922
      %1024 = vmatpush.msra.mxu0 %v844
      %1025 = vmatpush.msra.mxu0 %v842
      %1026 = vmatpush.msra.mxu0 %v908
      %1027 = vmatpush.msra.mxu0 %v906
      %1028 = vmatpush.msra.mxu0 %v892
      %1029 = vmatpush.msra.mxu0 %v890
      %1030 = vmatpush.msra.mxu0 %v876
      %1031 = vmatpush.msra.mxu0 %v874
      %1032 = vmatpush.msra.mxu0 %v860
      %1033 = vmatpush.msra.mxu0 %v858
      %1034 = vmatmul.f32.gmra.mxu0 %v974
      %v1035 = vpop.f32.mrf.mxu0
      %v1036 = vadd.f32 %v989, %v1035
      %1037 = vmatmul.f32.gmra.mxu0 %v976
      %v1038 = vpop.f32.mrf.mxu0
      %v1039 = vadd.f32 %v994, %v1038
      %1040 = vmatmul.f32.gmra.mxu0 %v978
      %v1041 = vpop.f32.mrf.mxu0
      %v1042 = vadd.f32 %v999, %v1041
      %1043 = vmatmul.f32.gmra.mxu0 %v980
      %v1044 = vpop.f32.mrf.mxu0
      %v1045 = vadd.f32 %v1004, %v1044
      %1046 = vdwg.mxu0
      %1047 = vmatpush.msra.mxu0 0.0
      %1048 = vmatpush.msra.mxu0 0.0
      %1049 = vmatpush.msra.mxu0 0.0
      %1050 = vmatpush.msra.mxu0 0.0
      %1051 = vmatpush.msra.mxu0 0.0
      %1052 = vmatpush.msra.mxu0 0.0
      %1053 = vmatpush.msra.mxu0 0.0
      %1054 = vmatpush.msra.mxu0 0.0
      %1055 = vmatpush.msra.mxu0 0.0
      %1056 = vmatpush.msra.mxu0 0.0
      %1057 = vmatpush.msra.mxu0 0.0
      %1058 = vmatpush.msra.mxu0 0.0
      %1059 = vmatpush.msra.mxu0 0.0
      %1060 = vmatpush.msra.mxu0 0.0
      %1061 = vmatpush.msra.mxu0 %v972
      %1062 = vmatpush.msra.mxu0 %v970
      %1063 = vmatmul.f32.gmra.mxu0 %v1007
      %v1064 = vpop.f32.mrf.mxu0
      %v1065 = vadd.f32 %v1036, %v1064
      %1066 = vmatmul.f32.gmra.mxu0 %v1010
      %v1067 = vpop.f32.mrf.mxu0
      %v1068 = vadd.f32 %v1039, %v1067
      %1069 = vmatmul.f32.gmra.mxu0 %v1013
      %v1070 = vpop.f32.mrf.mxu0
      %v1071 = vadd.f32 %v1042, %v1070
      %1072 = vmatmul.f32.gmra.mxu0 %v1016
      %v1073 = vpop.f32.mrf.mxu0
      %v1074 = vadd.f32 %v1045, %v1073
      %1075 = vdwg.mxu0
      %1076 = vmatpush.msra.mxu0 %v957
      %1077 = vmatpush.msra.mxu0 %v955
      %1078 = vmatpush.msra.mxu0 %v941
      %1079 = vmatpush.msra.mxu0 %v939
      %1080 = vmatpush.msra.mxu0 %v925
      %1081 = vmatpush.msra.mxu0 %v923
      %1082 = vmatpush.msra.mxu0 %v845
      %1083 = vmatpush.msra.mxu0 %v843
      %1084 = vmatpush.msra.mxu0 %v909
      %1085 = vmatpush.msra.mxu0 %v907
      %1086 = vmatpush.msra.mxu0 %v893
      %1087 = vmatpush.msra.mxu0 %v891
      %1088 = vmatpush.msra.mxu0 %v877
      %1089 = vmatpush.msra.mxu0 %v875
      %1090 = vmatpush.msra.mxu0 %v861
      %1091 = vmatpush.msra.mxu0 %v859
      %1092 = vmatmul.f32.gmra.mxu0 %v974
      %v1093 = vpop.f32.mrf.mxu0
      %v1094 = vadd.f32 %v989, %v1093
      %1095 = vmatmul.f32.gmra.mxu0 %v976
      %v1096 = vpop.f32.mrf.mxu0
      %v1097 = vadd.f32 %v994, %v1096
      %1098 = vmatmul.f32.gmra.mxu0 %v978
      %v1099 = vpop.f32.mrf.mxu0
      %v1100 = vadd.f32 %v999, %v1099
      %1101 = vmatmul.f32.gmra.mxu0 %v980
      %v1102 = vpop.f32.mrf.mxu0
      %v1103 = vadd.f32 %v1004, %v1102
      %1104 = vdwg.mxu0
      %1105 = vmatpush.msra.mxu0 0.0
      %1106 = vmatpush.msra.mxu0 0.0
      %1107 = vmatpush.msra.mxu0 0.0
      %1108 = vmatpush.msra.mxu0 0.0
      %1109 = vmatpush.msra.mxu0 0.0
      %1110 = vmatpush.msra.mxu0 0.0
      %1111 = vmatpush.msra.mxu0 0.0
      %1112 = vmatpush.msra.mxu0 0.0
      %1113 = vmatpush.msra.mxu0 0.0
      %1114 = vmatpush.msra.mxu0 0.0
      %1115 = vmatpush.msra.mxu0 0.0
      %1116 = vmatpush.msra.mxu0 0.0
      %1117 = vmatpush.msra.mxu0 0.0
      %1118 = vmatpush.msra.mxu0 0.0
      %1119 = vmatpush.msra.mxu0 %v973
      %1120 = vmatpush.msra.mxu0 %v971
      %1121 = vmatmul.f32.gmra.mxu0 %v1007
      %v1122 = vpop.f32.mrf.mxu0
      %v1123 = vadd.f32 %v1094, %v1122
      %1124 = vmatmul.f32.gmra.mxu0 %v1010
      %v1125 = vpop.f32.mrf.mxu0
      %v1126 = vadd.f32 %v1097, %v1125
      %1127 = vmatmul.f32.gmra.mxu0 %v1013
      %v1128 = vpop.f32.mrf.mxu0
      %v1129 = vadd.f32 %v1100, %v1128
      %1130 = vmatmul.f32.gmra.mxu0 %v1016
      %v1131 = vpop.f32.mrf.mxu0
      %v1132 = vadd.f32 %v1103, %v1131
      %1133 = vdwg.mxu0
      %v1134 = vmax.f32 %v1065, 0.0
      %v1135 = vmax.f32 %v1123, 0.0
      %v1136 = vmax.f32 %v1068, 0.0
      %v1137 = vmax.f32 %v1126, 0.0
      %v1138 = vmax.f32 %v1071, 0.0
      %v1139 = vmax.f32 %v1129, 0.0
      %v1140 = vmax.f32 %v1074, 0.0
      %v1141 = vmax.f32 %v1132, 0.0
      %1142 = vrot.lane.b32.xlu0 %v1134, 17
      %v1143 = vpop.permute.xlu0 %1142
      %1144 = vrot.lane.b32.xlu0 %v1136, 17
      %v1145 = vpop.permute.xlu0 %1144
      %1146 = vrot.lane.b32.xlu0 %v1138, 17
      %v1147 = vpop.permute.xlu0 %1146
      %1148 = vrot.lane.b32.xlu0 %v1140, 17
      %v1149 = vpop.permute.xlu0 %1148
      %1150 = vrot.lane.b32.xlu0 %v1135, 17
      %v1151 = vpop.permute.xlu0 %1150
      %1152 = vrot.lane.b32.xlu0 %v1137, 17
      %v1153 = vpop.permute.xlu0 %1152
      %1154 = vrot.lane.b32.xlu0 %v1139, 17
      %v1155 = vpop.permute.xlu0 %1154
      %1156 = vrot.lane.b32.xlu0 %v1141, 17
      %v1157 = vpop.permute.xlu0 %1156
      %v1158 = vsel %vm381, %v1143, %v1151
      %v1159 = vsel %vm381, %v1145, %v1153
      %v1160 = vsel %vm381, %v1147, %v1155
      %v1161 = vsel %vm381, %v1149, %v1157
      %v1162 = vsel %vm381, %v1151, %v1143
      %v1163 = vsel %vm381, %v1153, %v1145
      %v1164 = vsel %vm381, %v1155, %v1147
      %v1165 = vsel %vm381, %v1157, %v1149
      %v1166 = vmul.f32 %v1162, %v362
      %v1167 = vmul.f32 %v1158, %v363
      %v1168 = vmul.f32 %v1163, %v362
      %v1169 = vmul.f32 %v1159, %v363
      %v1170 = vmul.f32 %v1164, %v362
      %v1171 = vmul.f32 %v1160, %v363
      %v1172 = vmul.f32 %v1165, %v362
      %v1173 = vmul.f32 %v1161, %v363
      %1174 = vrot.lane.b32.xlu0 %v1134, 16
      %v1175 = vpop.permute.xlu0 %1174
      %1176 = vrot.lane.b32.xlu0 %v1136, 16
      %v1177 = vpop.permute.xlu0 %1176
      %1178 = vrot.lane.b32.xlu0 %v1138, 16
      %v1179 = vpop.permute.xlu0 %1178
      %1180 = vrot.lane.b32.xlu0 %v1140, 16
      %v1181 = vpop.permute.xlu0 %1180
      %1182 = vrot.lane.b32.xlu0 %v1135, 16
      %v1183 = vpop.permute.xlu0 %1182
      %1184 = vrot.lane.b32.xlu0 %v1137, 16
      %v1185 = vpop.permute.xlu0 %1184
      %1186 = vrot.lane.b32.xlu0 %v1139, 16
      %v1187 = vpop.permute.xlu0 %1186
      %1188 = vrot.lane.b32.xlu0 %v1141, 16
      %v1189 = vpop.permute.xlu0 %1188
      %v1190 = vsel %vm395, %v1175, %v1183
      %v1191 = vsel %vm395, %v1177, %v1185
      %v1192 = vsel %vm395, %v1179, %v1187
      %v1193 = vsel %vm395, %v1181, %v1189
      %v1194 = vsel %vm395, %v1183, %v1175
      %v1195 = vsel %vm395, %v1185, %v1177
      %v1196 = vsel %vm395, %v1187, %v1179
      %v1197 = vsel %vm395, %v1189, %v1181
      %v1198 = vmul.f32 %v1194, %v354
      %v1199 = vmul.f32 %v1190, %v355
      %v1200 = vmul.f32 %v1195, %v354
      %v1201 = vmul.f32 %v1191, %v355
      %v1202 = vmul.f32 %v1196, %v354
      %v1203 = vmul.f32 %v1192, %v355
      %v1204 = vmul.f32 %v1197, %v354
      %v1205 = vmul.f32 %v1193, %v355
      %1206 = vrot.lane.b32.xlu0 %v1134, 15
      %v1207 = vpop.permute.xlu0 %1206
      %1208 = vrot.lane.b32.xlu0 %v1136, 15
      %v1209 = vpop.permute.xlu0 %1208
      %1210 = vrot.lane.b32.xlu0 %v1138, 15
      %v1211 = vpop.permute.xlu0 %1210
      %1212 = vrot.lane.b32.xlu0 %v1140, 15
      %v1213 = vpop.permute.xlu0 %1212
      %1214 = vrot.lane.b32.xlu0 %v1135, 15
      %v1215 = vpop.permute.xlu0 %1214
      %1216 = vrot.lane.b32.xlu0 %v1137, 15
      %v1217 = vpop.permute.xlu0 %1216
      %1218 = vrot.lane.b32.xlu0 %v1139, 15
      %v1219 = vpop.permute.xlu0 %1218
      %1220 = vrot.lane.b32.xlu0 %v1141, 15
      %v1221 = vpop.permute.xlu0 %1220
      %v1222 = vsel %vm409, %v1207, %v1215
      %v1223 = vsel %vm409, %v1209, %v1217
      %v1224 = vsel %vm409, %v1211, %v1219
      %v1225 = vsel %vm409, %v1213, %v1221
      %v1226 = vsel %vm409, %v1215, %v1207
      %v1227 = vsel %vm409, %v1217, %v1209
      %v1228 = vsel %vm409, %v1219, %v1211
      %v1229 = vsel %vm409, %v1221, %v1213
      %v1230 = vmul.f32 %v1226, %v364
      %v1231 = vmul.f32 %v1222, %v365
      %v1232 = vmul.f32 %v1227, %v364
      %v1233 = vmul.f32 %v1223, %v365
      %v1234 = vmul.f32 %v1228, %v364
      %v1235 = vmul.f32 %v1224, %v365
      %v1236 = vmul.f32 %v1229, %v364
      %v1237 = vmul.f32 %v1225, %v365
      %1238 = vrot.lane.b32.xlu0 %v1134, 1
      %v1239 = vpop.permute.xlu0 %1238
      %1240 = vrot.lane.b32.xlu0 %v1136, 1
      %v1241 = vpop.permute.xlu0 %1240
      %1242 = vrot.lane.b32.xlu0 %v1138, 1
      %v1243 = vpop.permute.xlu0 %1242
      %1244 = vrot.lane.b32.xlu0 %v1140, 1
      %v1245 = vpop.permute.xlu0 %1244
      %1246 = vrot.lane.b32.xlu0 %v1135, 1
      %v1247 = vpop.permute.xlu0 %1246
      %1248 = vrot.lane.b32.xlu0 %v1137, 1
      %v1249 = vpop.permute.xlu0 %1248
      %1250 = vrot.lane.b32.xlu0 %v1139, 1
      %v1251 = vpop.permute.xlu0 %1250
      %1252 = vrot.lane.b32.xlu0 %v1141, 1
      %v1253 = vpop.permute.xlu0 %1252
      %v1254 = vsel %vm423, %v1239, %v1247
      %v1255 = vsel %vm423, %v1241, %v1249
      %v1256 = vsel %vm423, %v1243, %v1251
      %v1257 = vsel %vm423, %v1245, %v1253
      %v1258 = vsel %vm423, %v1247, %v1239
      %v1259 = vsel %vm423, %v1249, %v1241
      %v1260 = vsel %vm423, %v1251, %v1243
      %v1261 = vsel %vm423, %v1253, %v1245
      %v1262 = vmul.f32 %v1258, %v342
      %v1263 = vmul.f32 %v1254, %v343
      %v1264 = vmul.f32 %v1259, %v342
      %v1265 = vmul.f32 %v1255, %v343
      %v1266 = vmul.f32 %v1260, %v342
      %v1267 = vmul.f32 %v1256, %v343
      %v1268 = vmul.f32 %v1261, %v342
      %v1269 = vmul.f32 %v1257, %v343
      %1270 = vrot.lane.b32.xlu0 %v1134, 127
      %v1271 = vpop.permute.xlu0 %1270
      %1272 = vrot.lane.b32.xlu0 %v1136, 127
      %v1273 = vpop.permute.xlu0 %1272
      %1274 = vrot.lane.b32.xlu0 %v1138, 127
      %v1275 = vpop.permute.xlu0 %1274
      %1276 = vrot.lane.b32.xlu0 %v1140, 127
      %v1277 = vpop.permute.xlu0 %1276
      %1278 = vrot.lane.b32.xlu0 %v1135, 127
      %v1279 = vpop.permute.xlu0 %1278
      %1280 = vrot.lane.b32.xlu0 %v1137, 127
      %v1281 = vpop.permute.xlu0 %1280
      %1282 = vrot.lane.b32.xlu0 %v1139, 127
      %v1283 = vpop.permute.xlu0 %1282
      %1284 = vrot.lane.b32.xlu0 %v1141, 127
      %v1285 = vpop.permute.xlu0 %1284
      %v1286 = vsel %vm437, %v1271, %v1279
      %v1287 = vsel %vm437, %v1273, %v1281
      %v1288 = vsel %vm437, %v1275, %v1283
      %v1289 = vsel %vm437, %v1277, %v1285
      %v1290 = vsel %vm437, %v1279, %v1271
      %v1291 = vsel %vm437, %v1281, %v1273
      %v1292 = vsel %vm437, %v1283, %v1275
      %v1293 = vsel %vm437, %v1285, %v1277
      %v1294 = vmul.f32 %v1286, %v348
      %v1295 = vmul.f32 %v1290, %v349
      %v1296 = vmul.f32 %v1287, %v348
      %v1297 = vmul.f32 %v1291, %v349
      %v1298 = vmul.f32 %v1288, %v348
      %v1299 = vmul.f32 %v1292, %v349
      %v1300 = vmul.f32 %v1289, %v348
      %v1301 = vmul.f32 %v1293, %v349
      %1302 = vrot.lane.b32.xlu0 %v1134, 113
      %v1303 = vpop.permute.xlu0 %1302
      %1304 = vrot.lane.b32.xlu0 %v1136, 113
      %v1305 = vpop.permute.xlu0 %1304
      %1306 = vrot.lane.b32.xlu0 %v1138, 113
      %v1307 = vpop.permute.xlu0 %1306
      %1308 = vrot.lane.b32.xlu0 %v1140, 113
      %v1309 = vpop.permute.xlu0 %1308
      %1310 = vrot.lane.b32.xlu0 %v1135, 113
      %v1311 = vpop.permute.xlu0 %1310
      %1312 = vrot.lane.b32.xlu0 %v1137, 113
      %v1313 = vpop.permute.xlu0 %1312
      %1314 = vrot.lane.b32.xlu0 %v1139, 113
      %v1315 = vpop.permute.xlu0 %1314
      %1316 = vrot.lane.b32.xlu0 %v1141, 113
      %v1317 = vpop.permute.xlu0 %1316
      %v1318 = vsel %vm451, %v1303, %v1311
      %v1319 = vsel %vm451, %v1305, %v1313
      %v1320 = vsel %vm451, %v1307, %v1315
      %v1321 = vsel %vm451, %v1309, %v1317
      %v1322 = vsel %vm451, %v1311, %v1303
      %v1323 = vsel %vm451, %v1313, %v1305
      %v1324 = vsel %vm451, %v1315, %v1307
      %v1325 = vsel %vm451, %v1317, %v1309
      %v1326 = vmul.f32 %v1318, %v366
      %v1327 = vmul.f32 %v1322, %v367
      %v1328 = vmul.f32 %v1319, %v366
      %v1329 = vmul.f32 %v1323, %v367
      %v1330 = vmul.f32 %v1320, %v366
      %v1331 = vmul.f32 %v1324, %v367
      %v1332 = vmul.f32 %v1321, %v366
      %v1333 = vmul.f32 %v1325, %v367
      %1334 = vrot.lane.b32.xlu0 %v1134, 112
      %v1335 = vpop.permute.xlu0 %1334
      %1336 = vrot.lane.b32.xlu0 %v1136, 112
      %v1337 = vpop.permute.xlu0 %1336
      %1338 = vrot.lane.b32.xlu0 %v1138, 112
      %v1339 = vpop.permute.xlu0 %1338
      %1340 = vrot.lane.b32.xlu0 %v1140, 112
      %v1341 = vpop.permute.xlu0 %1340
      %1342 = vrot.lane.b32.xlu0 %v1135, 112
      %v1343 = vpop.permute.xlu0 %1342
      %1344 = vrot.lane.b32.xlu0 %v1137, 112
      %v1345 = vpop.permute.xlu0 %1344
      %1346 = vrot.lane.b32.xlu0 %v1139, 112
      %v1347 = vpop.permute.xlu0 %1346
      %1348 = vrot.lane.b32.xlu0 %v1141, 112
      %v1349 = vpop.permute.xlu0 %1348
      %v1350 = vsel %vm465, %v1335, %v1343
      %v1351 = vsel %vm465, %v1337, %v1345
      %v1352 = vsel %vm465, %v1339, %v1347
      %v1353 = vsel %vm465, %v1341, %v1349
      %v1354 = vsel %vm465, %v1343, %v1335
      %v1355 = vsel %vm465, %v1345, %v1337
      %v1356 = vsel %vm465, %v1347, %v1339
      %v1357 = vsel %vm465, %v1349, %v1341
      %v1358 = vmul.f32 %v1350, %v360
      %v1359 = vmul.f32 %v1354, %v361
      %v1360 = vmul.f32 %v1351, %v360
      %v1361 = vmul.f32 %v1355, %v361
      %v1362 = vmul.f32 %v1352, %v360
      %v1363 = vmul.f32 %v1356, %v361
      %v1364 = vmul.f32 %v1353, %v360
      %v1365 = vmul.f32 %v1357, %v361
      %1366 = vrot.lane.b32.xlu0 %v1134, 111
      %v1367 = vpop.permute.xlu0 %1366
      %1368 = vrot.lane.b32.xlu0 %v1136, 111
      %v1369 = vpop.permute.xlu0 %1368
      %1370 = vrot.lane.b32.xlu0 %v1138, 111
      %v1371 = vpop.permute.xlu0 %1370
      %1372 = vrot.lane.b32.xlu0 %v1140, 111
      %v1373 = vpop.permute.xlu0 %1372
      %1374 = vrot.lane.b32.xlu0 %v1135, 111
      %v1375 = vpop.permute.xlu0 %1374
      %1376 = vrot.lane.b32.xlu0 %v1137, 111
      %v1377 = vpop.permute.xlu0 %1376
      %1378 = vrot.lane.b32.xlu0 %v1139, 111
      %v1379 = vpop.permute.xlu0 %1378
      %1380 = vrot.lane.b32.xlu0 %v1141, 111
      %v1381 = vpop.permute.xlu0 %1380
      %v1382 = vsel %vm479, %v1367, %v1375
      %v1383 = vsel %vm479, %v1369, %v1377
      %v1384 = vsel %vm479, %v1371, %v1379
      %v1385 = vsel %vm479, %v1373, %v1381
      %v1386 = vsel %vm479, %v1375, %v1367
      %v1387 = vsel %vm479, %v1377, %v1369
      %v1388 = vsel %vm479, %v1379, %v1371
      %v1389 = vsel %vm479, %v1381, %v1373
      %v1390 = vmul.f32 %v1382, %v368
      %v1391 = vmul.f32 %v1386, %v369
      %v1392 = vmul.f32 %v1383, %v368
      %v1393 = vmul.f32 %v1387, %v369
      %v1394 = vmul.f32 %v1384, %v368
      %v1395 = vmul.f32 %v1388, %v369
      %v1396 = vmul.f32 %v1385, %v368
      %v1397 = vmul.f32 %v1389, %v369
      %v1398 = vld [vmem:[%s7] sm:$0xff]
      %v1399 = vld [vmem:[%s7 + $0x8] sm:$0xff]
      %v1400 = vld [vmem:[%s7 + $0x10] sm:$0xff]
      %v1401 = vld [vmem:[%s7 + $0x18] sm:$0xff]
      %v1402 = vld [vmem:[%s7 + $0x20] sm:$0xff]
      %v1403 = vld [vmem:[%s7 + $0x28] sm:$0xff]
      %v1404 = vld [vmem:[%s7 + $0x30] sm:$0xff]
      %v1405 = vld [vmem:[%s7 + $0x38] sm:$0xff]
      %v1406 = vld [vmem:[%s7 + $0x40] sm:$0xff]
      %v1407 = vld [vmem:[%s7 + $0x48] sm:$0xff]
      %v1408 = vld [vmem:[%s7 + $0x50] sm:$0xff]
      %v1409 = vld [vmem:[%s7 + $0x58] sm:$0xff]
      %v1410 = vld [vmem:[%s8] sm:$0xff]
      %v1411 = vld [vmem:[%s8 + $0x8] sm:$0xff]
      %v1412 = vld [vmem:[%s8 + $0x10] sm:$0xff]
      %v1413 = vld [vmem:[%s8 + $0x18] sm:$0xff]
      %1415 = vset.pattern.permute.xlu0 0
      %1416 = vperm.xlu0 %1415, %v1410
      %v1417 = vpop.permute.xlu0 %1416
      %1420 = vset.pattern.permute.xlu0 0
      %1421 = vperm.xlu0 %1420, %v1411
      %v1422 = vpop.permute.xlu0 %1421
      %1425 = vset.pattern.permute.xlu0 0
      %1426 = vperm.xlu0 %1425, %v1412
      %v1427 = vpop.permute.xlu0 %1426
      %1430 = vset.pattern.permute.xlu0 0
      %1431 = vperm.xlu0 %1430, %v1413
      %v1432 = vpop.permute.xlu0 %1431
      %vm1434 = vcmask 261120
      %v1436 = vsel %vm1434, %v1400, 0
      %v1439 = vsel %vm1434, %v1403, 0
      %v1442 = vsel %vm1434, %v1406, 0
      %v1445 = vsel %vm1434, %v1409, 0
      %1447 = vmatpush.msra.mxu0 %v1268
      %1448 = vmatpush.msra.mxu0 %v1266
      %1449 = vmatpush.msra.mxu0 %v1264
      %1450 = vmatpush.msra.mxu0 %v1262
      %1451 = vmatpush.msra.mxu0 %v1236
      %1452 = vmatpush.msra.mxu0 %v1234
      %1453 = vmatpush.msra.mxu0 %v1232
      %1454 = vmatpush.msra.mxu0 %v1230
      %1455 = vmatpush.msra.mxu0 %v1204
      %1456 = vmatpush.msra.mxu0 %v1202
      %1457 = vmatpush.msra.mxu0 %v1200
      %1458 = vmatpush.msra.mxu0 %v1198
      %1459 = vmatpush.msra.mxu0 %v1172
      %1460 = vmatpush.msra.mxu0 %v1170
      %1461 = vmatpush.msra.mxu0 %v1168
      %1462 = vmatpush.msra.mxu0 %v1166
      %1463 = vmatmul.f32.gmra.mxu0 %v1398
      %v1464 = vpop.f32.mrf.mxu0
      %v1465 = vadd.f32 %v1417, %v1464
      %1466 = vmatmul.f32.gmra.mxu0 %v1401
      %v1467 = vpop.f32.mrf.mxu0
      %v1468 = vadd.f32 %v1422, %v1467
      %1469 = vmatmul.f32.gmra.mxu0 %v1404
      %v1470 = vpop.f32.mrf.mxu0
      %v1471 = vadd.f32 %v1427, %v1470
      %1472 = vmatmul.f32.gmra.mxu0 %v1407
      %v1473 = vpop.f32.mrf.mxu0
      %v1474 = vadd.f32 %v1432, %v1473
      %1475 = vdwg.mxu0
      %1476 = vmatpush.msra.mxu0 %v1364
      %1477 = vmatpush.msra.mxu0 %v1362
      %1478 = vmatpush.msra.mxu0 %v1360
      %1479 = vmatpush.msra.mxu0 %v1358
      %1480 = vmatpush.msra.mxu0 %v1332
      %1481 = vmatpush.msra.mxu0 %v1330
      %1482 = vmatpush.msra.mxu0 %v1328
      %1483 = vmatpush.msra.mxu0 %v1326
      %1484 = vmatpush.msra.mxu0 %v1300
      %1485 = vmatpush.msra.mxu0 %v1298
      %1486 = vmatpush.msra.mxu0 %v1296
      %1487 = vmatpush.msra.mxu0 %v1294
      %1488 = vmatpush.msra.mxu0 %v1140
      %1489 = vmatpush.msra.mxu0 %v1138
      %1490 = vmatpush.msra.mxu0 %v1136
      %1491 = vmatpush.msra.mxu0 %v1134
      %1492 = vmatmul.f32.gmra.mxu0 %v1399
      %v1493 = vpop.f32.mrf.mxu0
      %v1494 = vadd.f32 %v1465, %v1493
      %1495 = vmatmul.f32.gmra.mxu0 %v1402
      %v1496 = vpop.f32.mrf.mxu0
      %v1497 = vadd.f32 %v1468, %v1496
      %1498 = vmatmul.f32.gmra.mxu0 %v1405
      %v1499 = vpop.f32.mrf.mxu0
      %v1500 = vadd.f32 %v1471, %v1499
      %1501 = vmatmul.f32.gmra.mxu0 %v1408
      %v1502 = vpop.f32.mrf.mxu0
      %v1503 = vadd.f32 %v1474, %v1502
      %1504 = vdwg.mxu0
      %1505 = vmatpush.msra.mxu0 0.0
      %1506 = vmatpush.msra.mxu0 0.0
      %1507 = vmatpush.msra.mxu0 0.0
      %1508 = vmatpush.msra.mxu0 0.0
      %1509 = vmatpush.msra.mxu0 0.0
      %1510 = vmatpush.msra.mxu0 0.0
      %1511 = vmatpush.msra.mxu0 0.0
      %1512 = vmatpush.msra.mxu0 0.0
      %1513 = vmatpush.msra.mxu0 0.0
      %1514 = vmatpush.msra.mxu0 0.0
      %1515 = vmatpush.msra.mxu0 0.0
      %1516 = vmatpush.msra.mxu0 0.0
      %1517 = vmatpush.msra.mxu0 %v1396
      %1518 = vmatpush.msra.mxu0 %v1394
      %1519 = vmatpush.msra.mxu0 %v1392
      %1520 = vmatpush.msra.mxu0 %v1390
      %1521 = vmatmul.f32.gmra.mxu0 %v1436
      %v1522 = vpop.f32.mrf.mxu0
      %v1523 = vadd.f32 %v1494, %v1522
      %1524 = vmatmul.f32.gmra.mxu0 %v1439
      %v1525 = vpop.f32.mrf.mxu0
      %v1526 = vadd.f32 %v1497, %v1525
      %1527 = vmatmul.f32.gmra.mxu0 %v1442
      %v1528 = vpop.f32.mrf.mxu0
      %v1529 = vadd.f32 %v1500, %v1528
      %1530 = vmatmul.f32.gmra.mxu0 %v1445
      %v1531 = vpop.f32.mrf.mxu0
      %v1532 = vadd.f32 %v1503, %v1531
      %1533 = vdwg.mxu0
      %1534 = vmatpush.msra.mxu0 %v1269
      %1535 = vmatpush.msra.mxu0 %v1267
      %1536 = vmatpush.msra.mxu0 %v1265
      %1537 = vmatpush.msra.mxu0 %v1263
      %1538 = vmatpush.msra.mxu0 %v1237
      %1539 = vmatpush.msra.mxu0 %v1235
      %1540 = vmatpush.msra.mxu0 %v1233
      %1541 = vmatpush.msra.mxu0 %v1231
      %1542 = vmatpush.msra.mxu0 %v1205
      %1543 = vmatpush.msra.mxu0 %v1203
      %1544 = vmatpush.msra.mxu0 %v1201
      %1545 = vmatpush.msra.mxu0 %v1199
      %1546 = vmatpush.msra.mxu0 %v1173
      %1547 = vmatpush.msra.mxu0 %v1171
      %1548 = vmatpush.msra.mxu0 %v1169
      %1549 = vmatpush.msra.mxu0 %v1167
      %1550 = vmatmul.f32.gmra.mxu0 %v1398
      %v1551 = vpop.f32.mrf.mxu0
      %v1552 = vadd.f32 %v1417, %v1551
      %1553 = vmatmul.f32.gmra.mxu0 %v1401
      %v1554 = vpop.f32.mrf.mxu0
      %v1555 = vadd.f32 %v1422, %v1554
      %1556 = vmatmul.f32.gmra.mxu0 %v1404
      %v1557 = vpop.f32.mrf.mxu0
      %v1558 = vadd.f32 %v1427, %v1557
      %1559 = vmatmul.f32.gmra.mxu0 %v1407
      %v1560 = vpop.f32.mrf.mxu0
      %v1561 = vadd.f32 %v1432, %v1560
      %1562 = vdwg.mxu0
      %1563 = vmatpush.msra.mxu0 %v1365
      %1564 = vmatpush.msra.mxu0 %v1363
      %1565 = vmatpush.msra.mxu0 %v1361
      %1566 = vmatpush.msra.mxu0 %v1359
      %1567 = vmatpush.msra.mxu0 %v1333
      %1568 = vmatpush.msra.mxu0 %v1331
      %1569 = vmatpush.msra.mxu0 %v1329
      %1570 = vmatpush.msra.mxu0 %v1327
      %1571 = vmatpush.msra.mxu0 %v1301
      %1572 = vmatpush.msra.mxu0 %v1299
      %1573 = vmatpush.msra.mxu0 %v1297
      %1574 = vmatpush.msra.mxu0 %v1295
      %1575 = vmatpush.msra.mxu0 %v1141
      %1576 = vmatpush.msra.mxu0 %v1139
      %1577 = vmatpush.msra.mxu0 %v1137
      %1578 = vmatpush.msra.mxu0 %v1135
      %1579 = vmatmul.f32.gmra.mxu0 %v1399
      %v1580 = vpop.f32.mrf.mxu0
      %v1581 = vadd.f32 %v1552, %v1580
      %1582 = vmatmul.f32.gmra.mxu0 %v1402
      %v1583 = vpop.f32.mrf.mxu0
      %v1584 = vadd.f32 %v1555, %v1583
      %1585 = vmatmul.f32.gmra.mxu0 %v1405
      %v1586 = vpop.f32.mrf.mxu0
      %v1587 = vadd.f32 %v1558, %v1586
      %1588 = vmatmul.f32.gmra.mxu0 %v1408
      %v1589 = vpop.f32.mrf.mxu0
      %v1590 = vadd.f32 %v1561, %v1589
      %1591 = vdwg.mxu0
      %1592 = vmatpush.msra.mxu0 0.0
      %1593 = vmatpush.msra.mxu0 0.0
      %1594 = vmatpush.msra.mxu0 0.0
      %1595 = vmatpush.msra.mxu0 0.0
      %1596 = vmatpush.msra.mxu0 0.0
      %1597 = vmatpush.msra.mxu0 0.0
      %1598 = vmatpush.msra.mxu0 0.0
      %1599 = vmatpush.msra.mxu0 0.0
      %1600 = vmatpush.msra.mxu0 0.0
      %1601 = vmatpush.msra.mxu0 0.0
      %1602 = vmatpush.msra.mxu0 0.0
      %1603 = vmatpush.msra.mxu0 0.0
      %1604 = vmatpush.msra.mxu0 %v1397
      %1605 = vmatpush.msra.mxu0 %v1395
      %1606 = vmatpush.msra.mxu0 %v1393
      %1607 = vmatpush.msra.mxu0 %v1391
      %1608 = vmatmul.f32.gmra.mxu0 %v1436
      %v1609 = vpop.f32.mrf.mxu0
      %v1610 = vadd.f32 %v1581, %v1609
      %1611 = vmatmul.f32.gmra.mxu0 %v1439
      %v1612 = vpop.f32.mrf.mxu0
      %v1613 = vadd.f32 %v1584, %v1612
      %1614 = vmatmul.f32.gmra.mxu0 %v1442
      %v1615 = vpop.f32.mrf.mxu0
      %v1616 = vadd.f32 %v1587, %v1615
      %1617 = vmatmul.f32.gmra.mxu0 %v1445
      %v1618 = vpop.f32.mrf.mxu0
      %v1619 = vadd.f32 %v1590, %v1618
      %1620 = vdwg.mxu0
      %v1621 = vmax.f32 %v1523, 0.0
      %v1622 = vmax.f32 %v1610, 0.0
      %v1623 = vmax.f32 %v1526, 0.0
      %v1624 = vmax.f32 %v1613, 0.0
      %v1625 = vmax.f32 %v1529, 0.0
      %v1626 = vmax.f32 %v1616, 0.0
      %v1627 = vmax.f32 %v1532, 0.0
      %v1628 = vmax.f32 %v1619, 0.0
      %1629 = vst [vmem:[%s332] sm:$0xff] %v1621
      %1630 = vst [vmem:[%s332 + $0x8] sm:$0xff] %v1622
      %1631 = vst [vmem:[%s332 + $0x10] sm:$0xff] %v1623
      %1632 = vst [vmem:[%s332 + $0x18] sm:$0xff] %v1624
      %1633 = vst [vmem:[%s332 + $0x20] sm:$0xff] %v1625
      %1634 = vst [vmem:[%s332 + $0x28] sm:$0xff] %v1626
      %1635 = vst [vmem:[%s332 + $0x30] sm:$0xff] %v1627
      %1636 = vst [vmem:[%s332 + $0x38] sm:$0xff] %v1628
      %p1637 = scmp.lt.s32.totalorder %s20, 1
      %s1638 = scalar_select %p1637, %s20, 1
      %s1639 = smul.addr %s1638, 8
      %s1640 = smul.addr %s1639, 8
      %s1641 = scalar_lea.vmem %s9, %s1640
      // Predicated region
      $region57: #{encoder_apply.1} parent=55 // pred_check
        %p1642 = pneg %p232
      $region58: #{encoder_apply.1} parent=55 // pred_check_branch
        %1644 = sbr.rel (%p1642) target = $region60
      $region59: #{encoder_apply.1} parent=55 // pred_region
        _
      $region60: #{encoder_apply.1} parent=55 // pred_fallthru
        _
    $region56: #{encoder_apply.1} parent=5 // pred_fallthru
      _
    %p1645 = scmp.le.s32.totalorder 2, %s15
    // Predicated region
    $region61: #{encoder_apply.1} parent=5 // pred_check
      %p1646 = pneg %p1645
    $region62: #{encoder_apply.1} parent=5 // pred_check_branch
      %1648 = sbr.rel (%p1646) target = $region64
    $region63: #{encoder_apply.1} parent=5 // pred_region
      %s1649 = ssub.s32 %s15, 2
      // Predicated region
      $region65: #{encoder_apply.1} parent=63 // pred_check
        %p1650 = pneg %p238
      $region66: #{encoder_apply.1} parent=63 // pred_check_branch
        %1652 = sbr.rel (%p1650) target = $region68
      $region67: #{encoder_apply.1} parent=63 // pred_region
        %p1653 = scmp.lt.s32.totalorder %s21, 1
        %s1654 = scalar_select %p1653, %s21, 1
        %s1655 = smul.addr %s1654, 8
        %s1656 = smul.addr %s1655, 8
        %s1657 = scalar_lea.vmem %s9, %s1656
      $region68: #{encoder_apply.1} parent=63 // pred_fallthru
        _
    $region64: #{encoder_apply.1} parent=5 // pred_fallthru
      _
  $region6: #{encoder_apply.1} parent=0 // loop_footer
    %s19 = sadd.s32 1, %s15
  $region7: #{encoder_apply.1} parent=0 // loop_footer_branch
    %14 = sbr.rel target = $region3
  $region8: #{encoder_apply.1} parent=0 // loop_exit
    _

</llo_original>
